<compile_context>
chip_gen: v7x
topology: tpu7x:2x2x1
jax: 0.10.0
libtpu: 0.0.40
codegen_flags: <defaults>
</compile_context>

<pallas_src>
import functools

import numpy as np
import jax
import jax.numpy as jnp
from jax import lax
from jax.experimental import pallas as pl
from jax.experimental.pallas import tpu as pltpu

# ----- model hyper-parameters (small synthetic encoder) -----
HIDDEN = 32
NUM_HEADS = 2
HEAD_DIM = HIDDEN // NUM_HEADS
NUM_LAYERS = 2
INTERMEDIATE = 64
VOCAB = 100
TYPE_VOCAB = 2
MAX_POS = 64
LN_EPS = 1e-12
SCALE = 1.0 / float(np.sqrt(HEAD_DIM))

# packed per-layer vector-parameter slab layout: 8 rows, lane-padded to 128
VEC_ROWS = 8
VEC_W = 128
# row indices inside the slab
_R_BQKV, _R_BO, _R_LN1G, _R_LN1B, _R_B1, _R_B2, _R_LN2G, _R_LN2B = range(8)


def _layer_norm_f32(x, g, b):
    # stats / rsqrt kept in f32 (eps=1e-12 is not representable in bf16);
    # rsqrt goes to the EUP slot.
    mean = jnp.mean(x, axis=-1, keepdims=True)
    var = jnp.mean(jnp.square(x - mean), axis=-1, keepdims=True)
    return (x - mean) * lax.rsqrt(var + LN_EPS) * g + b


# ----------------- fused encoder-stack kernel -----------------
def encoder_stack_kernel(
    # per-batch resident inputs
    x_emb_ref,      # [S, H]  f32   embedding sum (pre-LN)
    bias_ref,       # [1, S]  f32   HF-style (mask-1)*10000 additive bias
    emb_ln_ref,     # [2, H]  f32   embedding LayerNorm gamma / beta
    # per-layer streamed weights (leading layer axis squeezed away)
    wqkv_ref,       # [H, 3H] bf16  fused Q/K/V projection
    wo_ref,         # [H, H]  bf16
    w1_ref,         # [H, I]  bf16
    w2_ref,         # [I, H]  bf16
    vec_ref,        # [8, 128] f32  packed biases + LN params
    # outputs (resident across the layer axis)
    out_ref,        # [S, H]  f32   activation carry / last hidden state
    probs_ref,      # [nH*S, S] f32 attention probs (last layer survives)
):
    S = x_emb_ref.shape[0]
    l = pl.program_id(1)

    vec = vec_ref[...]                                     # [8, 128] f32
    bqkv = vec[_R_BQKV:_R_BQKV + 1, :3 * HIDDEN]
    bo = vec[_R_BO:_R_BO + 1, :HIDDEN]
    ln1_g = vec[_R_LN1G:_R_LN1G + 1, :HIDDEN]
    ln1_b = vec[_R_LN1B:_R_LN1B + 1, :HIDDEN]
    b1 = vec[_R_B1:_R_B1 + 1, :INTERMEDIATE]
    b2 = vec[_R_B2:_R_B2 + 1, :HIDDEN]
    ln2_g = vec[_R_LN2G:_R_LN2G + 1, :HIDDEN]
    ln2_b = vec[_R_LN2B:_R_LN2B + 1, :HIDDEN]

    # Layer 0: embedding LayerNorm written straight into the resident output
    # buffer, which doubles as the layer-to-layer activation carry in VMEM.
    @pl.when(l == 0)
    def _():
        emb_ln = emb_ln_ref[...]
        out_ref[...] = _layer_norm_f32(
            x_emb_ref[...], emb_ln[0:1, :], emb_ln[1:2, :])

    x = out_ref[...]                                       # [S, H] f32 (resident)
    x_bf = x.astype(jnp.bfloat16)                          # single cast per layer

    # ---- fused QKV projection: one MXU pass with N = 3H ----
    qkv = jnp.dot(x_bf, wqkv_ref[...],
                  preferred_element_type=jnp.float32) + bqkv   # [S, 3H] f32
    qkv_bf = qkv.astype(jnp.bfloat16)                      # single cast for q/k/v
    bias = bias_ref[...]                                   # [1, S] f32

    # ---- multi-head self-attention (static unroll over heads only) ----
    ctx_heads = []
    for h in range(NUM_HEADS):
        c0 = h * HEAD_DIM
        q = qkv_bf[:, c0:c0 + HEAD_DIM]
        k = qkv_bf[:, HIDDEN + c0:HIDDEN + c0 + HEAD_DIM]
        v = qkv_bf[:, 2 * HIDDEN + c0:2 * HIDDEN + c0 + HEAD_DIM]
        # contract last axes directly (q @ k^T) -- no explicit relayout
        scores = lax.dot_general(
            q, k, (((1,), (1,)), ((), ())),
            preferred_element_type=jnp.float32) * SCALE
        scores = scores + bias
        scores = scores - jnp.max(scores, axis=-1, keepdims=True)
        e = jnp.exp(scores)
        inv = pl.reciprocal(jnp.sum(e, axis=-1, keepdims=True), approx=True)
        p = e * inv                                        # f32 softmax
        # Write directly into the resident probs buffer every layer; HBM
        # writeback only happens once (constant index_map), so the last
        # layer's probs are what land in HBM.
        probs_ref[h * S:(h + 1) * S, :] = p
        ctx_heads.append(jnp.dot(p.astype(jnp.bfloat16), v,
                                 preferred_element_type=jnp.float32))

    # heads concatenated in registers -> feed output projection directly
    ctx = jnp.concatenate(ctx_heads, axis=-1).astype(jnp.bfloat16)   # [S, H]

    # ---- output projection + post-LN residual, FFN + post-LN residual ----
    attn_out = jnp.dot(ctx, wo_ref[...],
                       preferred_element_type=jnp.float32) + bo
    x1 = _layer_norm_f32(attn_out + x, ln1_g, ln1_b)
    h1 = jax.nn.gelu(
        jnp.dot(x1.astype(jnp.bfloat16), w1_ref[...],
                preferred_element_type=jnp.float32) + b1,
        approximate=True)                                   # tanh-GELU -> EUP
    ffn_out = jnp.dot(h1.astype(jnp.bfloat16), w2_ref[...],
                      preferred_element_type=jnp.float32) + b2
    out_ref[...] = _layer_norm_f32(ffn_out + x1, ln2_g, ln2_b)   # carry


def encoder_stack(params, x_emb, mask_bias):
    B, S, H = x_emb.shape
    resident = lambda b, l: (0, 0)
    per_batch = lambda b, l: (b, 0, 0)
    per_layer = lambda b, l: (l, 0, 0)

    in_specs = [
        pl.BlockSpec((None, S, H), per_batch),                 # x_emb
        pl.BlockSpec((None, 1, S), per_batch),                 # mask bias
        pl.BlockSpec((2, H), resident),                        # emb LN g/b
        pl.BlockSpec((None, H, 3 * H), per_layer),             # wqkv (bf16)
        pl.BlockSpec((None, H, H), per_layer),                 # wo   (bf16)
        pl.BlockSpec((None, H, INTERMEDIATE), per_layer),      # w1   (bf16)
        pl.BlockSpec((None, INTERMEDIATE, H), per_layer),      # w2   (bf16)
        pl.BlockSpec((None, VEC_ROWS, VEC_W), per_layer),      # packed vec params
    ]
    out_specs = (
        pl.BlockSpec((None, S, H), per_batch),                 # hidden states
        pl.BlockSpec((None, NUM_HEADS * S, S), per_batch),     # last-layer probs
    )
    out_shape = (
        jax.ShapeDtypeStruct((B, S, H), jnp.float32),
        jax.ShapeDtypeStruct((B, NUM_HEADS * S, S), jnp.float32),
    )
    out, probs = pl.pallas_call(
        encoder_stack_kernel,
        grid=(B, NUM_LAYERS),
        in_specs=in_specs,
        out_specs=out_specs,
        out_shape=out_shape,
        compiler_params=pltpu.CompilerParams(
            # batch axis parallel (2-TC sharding on v7x), layer axis is the
            # sequential resident-activation carry.
            dimension_semantics=("parallel", "arbitrary")),
    )(x_emb, mask_bias, params["emb_ln"],
      params["wqkv"], params["wo"], params["w1"], params["w2"], params["vec"])
    return out, probs.reshape(B, NUM_HEADS, S, S)


# ----------------- parameter construction -----------------
def _pack_vec_rows(vs):
    rows = [jnp.pad(v.astype(jnp.float32), (0, VEC_W - v.shape[0])) for v in vs]
    return jnp.stack(rows)                                   # [8, 128]


def init_params(key):
    def normal(k, shape, scale=0.02):
        return scale * jax.random.normal(k, shape, dtype=jnp.float32)

    n_layer_keys = 10
    keys = jax.random.split(key, 3 + n_layer_keys * NUM_LAYERS)
    params = {
        "word_emb": normal(keys[0], (VOCAB, HIDDEN)),
        "pos_emb": normal(keys[1], (MAX_POS, HIDDEN)),
        "type_emb": normal(keys[2], (TYPE_VOCAB, HIDDEN)),
        "emb_ln": jnp.stack([jnp.ones((HIDDEN,), jnp.float32),
                             jnp.zeros((HIDDEN,), jnp.float32)]),
    }
    wqkv_l, wo_l, w1_l, w2_l, vec_l = [], [], [], [], []
    for l in range(NUM_LAYERS):
        lk = keys[3 + n_layer_keys * l: 3 + n_layer_keys * (l + 1)]
        wq, wk, wv = (normal(lk[i], (HIDDEN, HIDDEN)) for i in range(3))
        wqkv_l.append(jnp.concatenate([wq, wk, wv], axis=1))   # fused [H, 3H]
        wo_l.append(normal(lk[3], (HIDDEN, HIDDEN)))
        w1_l.append(normal(lk[4], (HIDDEN, INTERMEDIATE)))
        w2_l.append(normal(lk[5], (INTERMEDIATE, HIDDEN)))
        bqkv = normal(lk[6], (3 * HIDDEN,))
        bo = normal(lk[7], (HIDDEN,))
        b1 = normal(lk[8], (INTERMEDIATE,))
        b2 = normal(lk[9], (HIDDEN,))
        ln1_g = jnp.ones((HIDDEN,), jnp.float32)
        ln1_b = jnp.zeros((HIDDEN,), jnp.float32)
        ln2_g = jnp.ones((HIDDEN,), jnp.float32)
        ln2_b = jnp.zeros((HIDDEN,), jnp.float32)
        vec_l.append(_pack_vec_rows(
            [bqkv, bo, ln1_g, ln1_b, b1, b2, ln2_g, ln2_b]))
    params.update({
        # MXU weights stored bf16 (halves HBM/VMEM traffic; f32 accumulation)
        "wqkv": jnp.stack(wqkv_l).astype(jnp.bfloat16),
        "wo": jnp.stack(wo_l).astype(jnp.bfloat16),
        "w1": jnp.stack(w1_l).astype(jnp.bfloat16),
        "w2": jnp.stack(w2_l).astype(jnp.bfloat16),
        "vec": jnp.stack(vec_l),                              # [L, 8, 128] f32
    })
    return params


# ----------------- full forward pass -----------------
def transformer_forward(params, batch_token_seqs, batch_token_masks, batch_token_types):
    B, S = batch_token_seqs.shape
    assert S <= MAX_POS, "short-sequence branch requires S <= MAX_POS"
    # TODO(synk): embedding gathers kept as plain-JAX glue (DMA-gather kernel)
    pos = jnp.arange(S)
    x_emb = (
        params["word_emb"][batch_token_seqs]
        + params["pos_emb"][pos][None, :, :]
        + params["type_emb"][batch_token_types]
    ).astype(jnp.float32)                                      # [B, S, H]
    # HF-style additive attention-mask bias, precomputed once in f32
    mask_bias = ((batch_token_masks.astype(jnp.float32) - 1.0)
                 * 10000.0)[:, None, :]                        # [B, 1, S]

    batch_token_embs, batch_token_atts = encoder_stack(params, x_emb, mask_bias)
    return batch_token_embs, batch_token_atts


if __name__ == "__main__":
    B, S = 2, 8
    key = jax.random.PRNGKey(0)
    k_param, k_ids, k_types = jax.random.split(key, 3)

    params = init_params(k_param)
    batch_token_seqs = jax.random.randint(k_ids, (B, S), 0, VOCAB, dtype=jnp.int32)
    batch_token_types = jax.random.randint(k_types, (B, S), 0, TYPE_VOCAB, dtype=jnp.int32)
    # second sequence has 2 padding positions
    batch_token_masks = jnp.array(
        [[1.0] * S, [1.0] * (S - 2) + [0.0, 0.0]], dtype=jnp.float32
    )

    fwd = jax.jit(functools.partial(transformer_forward, params))
    embs, atts = fwd(batch_token_seqs, batch_token_masks, batch_token_types)
    jax.block_until_ready((embs, atts))

    assert embs.shape == (B, S, HIDDEN)
    assert atts.shape == (B, NUM_HEADS, S, S)
    print("KERNEL_OK")
</pallas_src>

<mosaic_0001>
module attributes {stable_mosaic.version = 11 : i64} {
  func.func @encoder_stack_kernel(%arg0: i32, %arg1: i32, %arg2: memref<1x8x32xf32, #tpu.memory_space<vmem>>, %arg3: memref<1x1x8xf32, #tpu.memory_space<vmem>>, %arg4: memref<2x32xf32, #tpu.memory_space<vmem>>, %arg5: memref<1x32x96xbf16, #tpu.memory_space<vmem>>, %arg6: memref<1x32x32xbf16, #tpu.memory_space<vmem>>, %arg7: memref<1x32x64xbf16, #tpu.memory_space<vmem>>, %arg8: memref<1x64x32xbf16, #tpu.memory_space<vmem>>, %arg9: memref<1x8x128xf32, #tpu.memory_space<vmem>>, %arg10: memref<1x8x32xf32, #tpu.memory_space<vmem>>, %arg11: memref<1x16x8xf32, #tpu.memory_space<vmem>>) attributes {dimension_semantics = [#tpu.dimension_semantics<parallel>, #tpu.dimension_semantics<arbitrary>], iteration_bounds = array<i64: 2, 2>, scalar_prefetch = 0 : i64, scratch_operands = 0 : i64, tpu.core_type = #tpu.core_type<tc>, window_params = [{transform_indices = @transform_0, window_bounds = array<i64: 1, 8, 32>}, {transform_indices = @transform_1, window_bounds = array<i64: 1, 1, 8>}, {pipeline_mode = #tpu.pipeline_mode<synchronous>, transform_indices = @transform_2, window_bounds = array<i64: 2, 32>}, {transform_indices = @transform_3, window_bounds = array<i64: 1, 32, 96>}, {transform_indices = @transform_4, window_bounds = array<i64: 1, 32, 32>}, {transform_indices = @transform_5, window_bounds = array<i64: 1, 32, 64>}, {transform_indices = @transform_6, window_bounds = array<i64: 1, 64, 32>}, {transform_indices = @transform_7, window_bounds = array<i64: 1, 8, 128>}, {transform_indices = @transform_8, window_bounds = array<i64: 1, 8, 32>}, {transform_indices = @transform_9, window_bounds = array<i64: 1, 16, 8>}]} {
    %c0 = arith.constant 0 : index
    %c0_0 = arith.constant 0 : index
    %c0_1 = arith.constant 0 : index
    %0 = vector.load %arg9[%c0, %c0_0, %c0_1] : memref<1x8x128xf32, #tpu.memory_space<vmem>>, vector<1x8x128xf32>
    %1 = vector.shape_cast %0 : vector<1x8x128xf32> to vector<8x128xf32>
    %2 = vector.extract_strided_slice %1 {offsets = [0, 0], sizes = [1, 96], strides = [1, 1]} : vector<8x128xf32> to vector<1x96xf32>
    %3 = vector.extract_strided_slice %1 {offsets = [1, 0], sizes = [1, 32], strides = [1, 1]} : vector<8x128xf32> to vector<1x32xf32>
    %4 = vector.extract_strided_slice %1 {offsets = [2, 0], sizes = [1, 32], strides = [1, 1]} : vector<8x128xf32> to vector<1x32xf32>
    %5 = vector.extract_strided_slice %1 {offsets = [3, 0], sizes = [1, 32], strides = [1, 1]} : vector<8x128xf32> to vector<1x32xf32>
    %6 = vector.extract_strided_slice %1 {offsets = [4, 0], sizes = [1, 64], strides = [1, 1]} : vector<8x128xf32> to vector<1x64xf32>
    %7 = vector.extract_strided_slice %1 {offsets = [5, 0], sizes = [1, 32], strides = [1, 1]} : vector<8x128xf32> to vector<1x32xf32>
    %8 = vector.extract_strided_slice %1 {offsets = [6, 0], sizes = [1, 32], strides = [1, 1]} : vector<8x128xf32> to vector<1x32xf32>
    %9 = vector.extract_strided_slice %1 {offsets = [7, 0], sizes = [1, 32], strides = [1, 1]} : vector<8x128xf32> to vector<1x32xf32>
    %c0_i32 = arith.constant 0 : i32
    %10 = arith.cmpi eq, %arg1, %c0_i32 : i32
    %11 = arith.extui %10 : i1 to i32
    %c0_i32_2 = arith.constant 0 : i32
    %12 = arith.cmpi ne, %11, %c0_i32_2 : i32
    scf.if %12 {
      %c0_56 = arith.constant 0 : index
      %c0_57 = arith.constant 0 : index
      %151 = vector.load %arg4[%c0_56, %c0_57] : memref<2x32xf32, #tpu.memory_space<vmem>>, vector<2x32xf32>
      %c0_58 = arith.constant 0 : index
      %c0_59 = arith.constant 0 : index
      %c0_60 = arith.constant 0 : index
      %152 = vector.load %arg2[%c0_58, %c0_59, %c0_60] : memref<1x8x32xf32, #tpu.memory_space<vmem>>, vector<1x8x32xf32>
      %153 = vector.shape_cast %152 : vector<1x8x32xf32> to vector<8x32xf32>
      %154 = vector.extract_strided_slice %151 {offsets = [0, 0], sizes = [1, 32], strides = [1, 1]} : vector<2x32xf32> to vector<1x32xf32>
      %155 = vector.extract_strided_slice %151 {offsets = [1, 0], sizes = [1, 32], strides = [1, 1]} : vector<2x32xf32> to vector<1x32xf32>
      %cst_61 = arith.constant dense<0.000000e+00> : vector<8xf32>
      %156 = vector.multi_reduction <add>, %153, %cst_61 [1] : vector<8x32xf32> to vector<8xf32>
      %157 = vector.shape_cast %156 : vector<8xf32> to vector<8x1xf32>
      %cst_62 = arith.constant 3.200000e+01 : f32
      %158 = vector.broadcast %cst_62 : f32 to vector<8x1xf32>
      %159 = arith.divf %157, %158 : vector<8x1xf32>
      %160 = vector.broadcast %159 : vector<8x1xf32> to vector<8x32xf32>
      %161 = arith.subf %153, %160 : vector<8x32xf32>
      %162 = arith.mulf %161, %161 : vector<8x32xf32>
      %cst_63 = arith.constant dense<0.000000e+00> : vector<8xf32>
      %163 = vector.multi_reduction <add>, %162, %cst_63 [1] : vector<8x32xf32> to vector<8xf32>
      %164 = vector.shape_cast %163 : vector<8xf32> to vector<8x1xf32>
      %cst_64 = arith.constant 3.200000e+01 : f32
      %165 = vector.broadcast %cst_64 : f32 to vector<8x1xf32>
      %166 = arith.divf %164, %165 : vector<8x1xf32>
      %167 = vector.broadcast %159 : vector<8x1xf32> to vector<8x32xf32>
      %168 = arith.subf %153, %167 : vector<8x32xf32>
      %cst_65 = arith.constant 9.99999996E-13 : f32
      %169 = vector.broadcast %cst_65 : f32 to vector<8x1xf32>
      %170 = arith.addf %166, %169 : vector<8x1xf32>
      %171 = math.rsqrt %170 : vector<8x1xf32>
      %172 = vector.broadcast %171 : vector<8x1xf32> to vector<8x32xf32>
      %173 = arith.mulf %168, %172 : vector<8x32xf32>
      %174 = vector.broadcast %154 : vector<1x32xf32> to vector<8x32xf32>
      %175 = arith.mulf %173, %174 : vector<8x32xf32>
      %176 = vector.broadcast %155 : vector<1x32xf32> to vector<8x32xf32>
      %177 = arith.addf %175, %176 : vector<8x32xf32>
      %c0_66 = arith.constant 0 : index
      %c0_67 = arith.constant 0 : index
      %c0_68 = arith.constant 0 : index
      %178 = vector.load %arg10[%c0_66, %c0_67, %c0_68] : memref<1x8x32xf32, #tpu.memory_space<vmem>>, vector<1x8x32xf32>
      %179 = vector.shape_cast %178 : vector<1x8x32xf32> to vector<8x32xf32>
      %180 = vector.shape_cast %177 : vector<8x32xf32> to vector<1x8x32xf32>
      tpu.vector_store %arg10[%c0_66, %c0_67, %c0_68], %180 {strides = array<i32>} : memref<1x8x32xf32, #tpu.memory_space<vmem>>, vector<1x8x32xf32>,
    } else {
    }
    %c0_3 = arith.constant 0 : index
    %c0_4 = arith.constant 0 : index
    %c0_5 = arith.constant 0 : index
    %13 = vector.load %arg10[%c0_3, %c0_4, %c0_5] : memref<1x8x32xf32, #tpu.memory_space<vmem>>, vector<1x8x32xf32>
    %14 = vector.shape_cast %13 : vector<1x8x32xf32> to vector<8x32xf32>
    %15 = arith.truncf %14 : vector<8x32xf32> to vector<8x32xbf16>
    %c0_6 = arith.constant 0 : index
    %c0_7 = arith.constant 0 : index
    %c0_8 = arith.constant 0 : index
    %16 = vector.load %arg5[%c0_6, %c0_7, %c0_8] : memref<1x32x96xbf16, #tpu.memory_space<vmem>>, vector<1x32x96xbf16>
    %17 = vector.shape_cast %16 : vector<1x32x96xbf16> to vector<32x96xbf16>
    %cst = arith.constant dense<0.000000e+00> : vector<8x96xf32>
    %18 = tpu.matmul %15, %17, %cst {dimension_numbers = #tpu.dot_dimension_numbers<[1], [0], [0], [1], [0, 0, 1, 1], [], []>} : vector<8x32xbf16>, vector<32x96xbf16>, vector<8x96xf32> -> vector<8x96xf32>
    %19 = vector.broadcast %2 : vector<1x96xf32> to vector<8x96xf32>
    %20 = arith.addf %18, %19 : vector<8x96xf32>
    %21 = arith.truncf %20 : vector<8x96xf32> to vector<8x96xbf16>
    %c0_9 = arith.constant 0 : index
    %c0_10 = arith.constant 0 : index
    %c0_11 = arith.constant 0 : index
    %22 = vector.load %arg3[%c0_9, %c0_10, %c0_11] : memref<1x1x8xf32, #tpu.memory_space<vmem>>, vector<1x1x8xf32>
    %23 = vector.shape_cast %22 : vector<1x1x8xf32> to vector<1x8xf32>
    %24 = vector.extract_strided_slice %21 {offsets = [0, 0], sizes = [8, 16], strides = [1, 1]} : vector<8x96xbf16> to vector<8x16xbf16>
    %25 = vector.extract_strided_slice %21 {offsets = [0, 32], sizes = [8, 16], strides = [1, 1]} : vector<8x96xbf16> to vector<8x16xbf16>
    %26 = vector.extract_strided_slice %21 {offsets = [0, 64], sizes = [8, 16], strides = [1, 1]} : vector<8x96xbf16> to vector<8x16xbf16>
    %cst_12 = arith.constant dense<0.000000e+00> : vector<8x8xf32>
    %27 = tpu.matmul %24, %25, %cst_12 {dimension_numbers = #tpu.dot_dimension_numbers<[1], [1], [0], [0], [0, 0, 1, 0], [], []>} : vector<8x16xbf16>, vector<8x16xbf16>, vector<8x8xf32> -> vector<8x8xf32>
    %cst_13 = arith.constant 2.500000e-01 : f32
    %28 = vector.broadcast %cst_13 : f32 to vector<8x8xf32>
    %29 = arith.mulf %27, %28 : vector<8x8xf32>
    %30 = vector.broadcast %23 : vector<1x8xf32> to vector<8x8xf32>
    %31 = arith.addf %29, %30 : vector<8x8xf32>
    %cst_14 = arith.constant dense<0xFF800000> : vector<8xf32>
    %32 = vector.multi_reduction <maximumf>, %31, %cst_14 [1] : vector<8x8xf32> to vector<8xf32>
    %33 = vector.shape_cast %32 : vector<8xf32> to vector<8x1xf32>
    %34 = vector.broadcast %33 : vector<8x1xf32> to vector<8x8xf32>
    %35 = arith.subf %31, %34 : vector<8x8xf32>
    %36 = math.exp %35 : vector<8x8xf32>
    %cst_15 = arith.constant dense<0.000000e+00> : vector<8xf32>
    %37 = vector.multi_reduction <add>, %36, %cst_15 [1] : vector<8x8xf32> to vector<8xf32>
    %38 = vector.shape_cast %37 : vector<8xf32> to vector<8x1xf32>
    %39 = tpu.reciprocal %38 {approx = true} : vector<8x1xf32> -> vector<8x1xf32>
    %40 = vector.broadcast %39 : vector<8x1xf32> to vector<8x8xf32>
    %41 = arith.mulf %36, %40 : vector<8x8xf32>
    %c0_16 = arith.constant 0 : index
    %c0_17 = arith.constant 0 : index
    %c0_18 = arith.constant 0 : index
    %42 = vector.load %arg11[%c0_16, %c0_17, %c0_18] : memref<1x16x8xf32, #tpu.memory_space<vmem>>, vector<1x8x8xf32>
    %43 = vector.shape_cast %42 : vector<1x8x8xf32> to vector<8x8xf32>
    %44 = vector.shape_cast %41 : vector<8x8xf32> to vector<1x8x8xf32>
    tpu.vector_store %arg11[%c0_16, %c0_17, %c0_18], %44 {strides = array<i32>} : memref<1x16x8xf32, #tpu.memory_space<vmem>>, vector<1x8x8xf32>,
    %45 = arith.truncf %41 : vector<8x8xf32> to vector<8x8xbf16>
    %cst_19 = arith.constant dense<0.000000e+00> : vector<8x16xf32>
    %46 = tpu.matmul %45, %26, %cst_19 {dimension_numbers = #tpu.dot_dimension_numbers<[1], [0], [0], [1], [0, 0, 1, 1], [], []>} : vector<8x8xbf16>, vector<8x16xbf16>, vector<8x16xf32> -> vector<8x16xf32>
    %47 = vector.extract_strided_slice %21 {offsets = [0, 16], sizes = [8, 16], strides = [1, 1]} : vector<8x96xbf16> to vector<8x16xbf16>
    %48 = vector.extract_strided_slice %21 {offsets = [0, 48], sizes = [8, 16], strides = [1, 1]} : vector<8x96xbf16> to vector<8x16xbf16>
    %49 = vector.extract_strided_slice %21 {offsets = [0, 80], sizes = [8, 16], strides = [1, 1]} : vector<8x96xbf16> to vector<8x16xbf16>
    %cst_20 = arith.constant dense<0.000000e+00> : vector<8x8xf32>
    %50 = tpu.matmul %47, %48, %cst_20 {dimension_numbers = #tpu.dot_dimension_numbers<[1], [1], [0], [0], [0, 0, 1, 0], [], []>} : vector<8x16xbf16>, vector<8x16xbf16>, vector<8x8xf32> -> vector<8x8xf32>
    %cst_21 = arith.constant 2.500000e-01 : f32
    %51 = vector.broadcast %cst_21 : f32 to vector<8x8xf32>
    %52 = arith.mulf %50, %51 : vector<8x8xf32>
    %53 = vector.broadcast %23 : vector<1x8xf32> to vector<8x8xf32>
    %54 = arith.addf %52, %53 : vector<8x8xf32>
    %cst_22 = arith.constant dense<0xFF800000> : vector<8xf32>
    %55 = vector.multi_reduction <maximumf>, %54, %cst_22 [1] : vector<8x8xf32> to vector<8xf32>
    %56 = vector.shape_cast %55 : vector<8xf32> to vector<8x1xf32>
    %57 = vector.broadcast %56 : vector<8x1xf32> to vector<8x8xf32>
    %58 = arith.subf %54, %57 : vector<8x8xf32>
    %59 = math.exp %58 : vector<8x8xf32>
    %cst_23 = arith.constant dense<0.000000e+00> : vector<8xf32>
    %60 = vector.multi_reduction <add>, %59, %cst_23 [1] : vector<8x8xf32> to vector<8xf32>
    %61 = vector.shape_cast %60 : vector<8xf32> to vector<8x1xf32>
    %62 = tpu.reciprocal %61 {approx = true} : vector<8x1xf32> -> vector<8x1xf32>
    %63 = vector.broadcast %62 : vector<8x1xf32> to vector<8x8xf32>
    %64 = arith.mulf %59, %63 : vector<8x8xf32>
    %c0_24 = arith.constant 0 : index
    %c8 = arith.constant 8 : index
    %c0_25 = arith.constant 0 : index
    %65 = vector.load %arg11[%c0_24, %c8, %c0_25] : memref<1x16x8xf32, #tpu.memory_space<vmem>>, vector<1x8x8xf32>
    %66 = vector.shape_cast %65 : vector<1x8x8xf32> to vector<8x8xf32>
    %67 = vector.shape_cast %64 : vector<8x8xf32> to vector<1x8x8xf32>
    tpu.vector_store %arg11[%c0_24, %c8, %c0_25], %67 {strides = array<i32>} : memref<1x16x8xf32, #tpu.memory_space<vmem>>, vector<1x8x8xf32>,
    %68 = arith.truncf %64 : vector<8x8xf32> to vector<8x8xbf16>
    %cst_26 = arith.constant dense<0.000000e+00> : vector<8x16xf32>
    %69 = tpu.matmul %68, %49, %cst_26 {dimension_numbers = #tpu.dot_dimension_numbers<[1], [0], [0], [1], [0, 0, 1, 1], [], []>} : vector<8x8xbf16>, vector<8x16xbf16>, vector<8x16xf32> -> vector<8x16xf32>
    %70 = tpu.concatenate %46, %69 in 1 : vector<8x16xf32>, vector<8x16xf32> -> vector<8x32xf32>
    %71 = arith.truncf %70 : vector<8x32xf32> to vector<8x32xbf16>
    %c0_27 = arith.constant 0 : index
    %c0_28 = arith.constant 0 : index
    %c0_29 = arith.constant 0 : index
    %72 = vector.load %arg6[%c0_27, %c0_28, %c0_29] : memref<1x32x32xbf16, #tpu.memory_space<vmem>>, vector<1x32x32xbf16>
    %73 = vector.shape_cast %72 : vector<1x32x32xbf16> to vector<32x32xbf16>
    %cst_30 = arith.constant dense<0.000000e+00> : vector<8x32xf32>
    %74 = tpu.matmul %71, %73, %cst_30 {dimension_numbers = #tpu.dot_dimension_numbers<[1], [0], [0], [1], [0, 0, 1, 1], [], []>} : vector<8x32xbf16>, vector<32x32xbf16>, vector<8x32xf32> -> vector<8x32xf32>
    %75 = vector.broadcast %3 : vector<1x32xf32> to vector<8x32xf32>
    %76 = arith.addf %74, %75 : vector<8x32xf32>
    %77 = arith.addf %76, %14 : vector<8x32xf32>
    %cst_31 = arith.constant dense<0.000000e+00> : vector<8xf32>
    %78 = vector.multi_reduction <add>, %77, %cst_31 [1] : vector<8x32xf32> to vector<8xf32>
    %79 = vector.shape_cast %78 : vector<8xf32> to vector<8x1xf32>
    %cst_32 = arith.constant 3.200000e+01 : f32
    %80 = vector.broadcast %cst_32 : f32 to vector<8x1xf32>
    %81 = arith.divf %79, %80 : vector<8x1xf32>
    %82 = vector.broadcast %81 : vector<8x1xf32> to vector<8x32xf32>
    %83 = arith.subf %77, %82 : vector<8x32xf32>
    %84 = arith.mulf %83, %83 : vector<8x32xf32>
    %cst_33 = arith.constant dense<0.000000e+00> : vector<8xf32>
    %85 = vector.multi_reduction <add>, %84, %cst_33 [1] : vector<8x32xf32> to vector<8xf32>
    %86 = vector.shape_cast %85 : vector<8xf32> to vector<8x1xf32>
    %cst_34 = arith.constant 3.200000e+01 : f32
    %87 = vector.broadcast %cst_34 : f32 to vector<8x1xf32>
    %88 = arith.divf %86, %87 : vector<8x1xf32>
    %89 = vector.broadcast %81 : vector<8x1xf32> to vector<8x32xf32>
    %90 = arith.subf %77, %89 : vector<8x32xf32>
    %cst_35 = arith.constant 9.99999996E-13 : f32
    %91 = vector.broadcast %cst_35 : f32 to vector<8x1xf32>
    %92 = arith.addf %88, %91 : vector<8x1xf32>
    %93 = math.rsqrt %92 : vector<8x1xf32>
    %94 = vector.broadcast %93 : vector<8x1xf32> to vector<8x32xf32>
    %95 = arith.mulf %90, %94 : vector<8x32xf32>
    %96 = vector.broadcast %4 : vector<1x32xf32> to vector<8x32xf32>
    %97 = arith.mulf %95, %96 : vector<8x32xf32>
    %98 = vector.broadcast %5 : vector<1x32xf32> to vector<8x32xf32>
    %99 = arith.addf %97, %98 : vector<8x32xf32>
    %100 = arith.truncf %99 : vector<8x32xf32> to vector<8x32xbf16>
    %c0_36 = arith.constant 0 : index
    %c0_37 = arith.constant 0 : index
    %c0_38 = arith.constant 0 : index
    %101 = vector.load %arg7[%c0_36, %c0_37, %c0_38] : memref<1x32x64xbf16, #tpu.memory_space<vmem>>, vector<1x32x64xbf16>
    %102 = vector.shape_cast %101 : vector<1x32x64xbf16> to vector<32x64xbf16>
    %cst_39 = arith.constant dense<0.000000e+00> : vector<8x64xf32>
    %103 = tpu.matmul %100, %102, %cst_39 {dimension_numbers = #tpu.dot_dimension_numbers<[1], [0], [0], [1], [0, 0, 1, 1], [], []>} : vector<8x32xbf16>, vector<32x64xbf16>, vector<8x64xf32> -> vector<8x64xf32>
    %104 = vector.broadcast %6 : vector<1x64xf32> to vector<8x64xf32>
    %105 = arith.addf %103, %104 : vector<8x64xf32>
    %106 = arith.mulf %105, %105 : vector<8x64xf32>
    %107 = arith.mulf %105, %106 : vector<8x64xf32>
    %cst_40 = arith.constant 4.471500e-02 : f32
    %108 = vector.broadcast %cst_40 : f32 to vector<8x64xf32>
    %109 = arith.mulf %108, %107 : vector<8x64xf32>
    %110 = arith.addf %105, %109 : vector<8x64xf32>
    %cst_41 = arith.constant 0.797884583 : f32
    %111 = vector.broadcast %cst_41 : f32 to vector<8x64xf32>
    %112 = arith.mulf %111, %110 : vector<8x64xf32>
    %113 = math.tanh %112 : vector<8x64xf32>
    %cst_42 = arith.constant 1.000000e+00 : f32
    %114 = vector.broadcast %cst_42 : f32 to vector<8x64xf32>
    %115 = arith.addf %114, %113 : vector<8x64xf32>
    %cst_43 = arith.constant 5.000000e-01 : f32
    %116 = vector.broadcast %cst_43 : f32 to vector<8x64xf32>
    %117 = arith.mulf %116, %115 : vector<8x64xf32>
    %118 = arith.mulf %105, %117 : vector<8x64xf32>
    %119 = arith.truncf %118 : vector<8x64xf32> to vector<8x64xbf16>
    %c0_44 = arith.constant 0 : index
    %c0_45 = arith.constant 0 : index
    %c0_46 = arith.constant 0 : index
    %120 = vector.load %arg8[%c0_44, %c0_45, %c0_46] : memref<1x64x32xbf16, #tpu.memory_space<vmem>>, vector<1x64x32xbf16>
    %121 = vector.shape_cast %120 : vector<1x64x32xbf16> to vector<64x32xbf16>
    %cst_47 = arith.constant dense<0.000000e+00> : vector<8x32xf32>
    %122 = tpu.matmul %119, %121, %cst_47 {dimension_numbers = #tpu.dot_dimension_numbers<[1], [0], [0], [1], [0, 0, 1, 1], [], []>} : vector<8x64xbf16>, vector<64x32xbf16>, vector<8x32xf32> -> vector<8x32xf32>
    %123 = vector.broadcast %7 : vector<1x32xf32> to vector<8x32xf32>
    %124 = arith.addf %122, %123 : vector<8x32xf32>
    %125 = arith.addf %124, %99 : vector<8x32xf32>
    %cst_48 = arith.constant dense<0.000000e+00> : vector<8xf32>
    %126 = vector.multi_reduction <add>, %125, %cst_48 [1] : vector<8x32xf32> to vector<8xf32>
    %127 = vector.shape_cast %126 : vector<8xf32> to vector<8x1xf32>
    %cst_49 = arith.constant 3.200000e+01 : f32
    %128 = vector.broadcast %cst_49 : f32 to vector<8x1xf32>
    %129 = arith.divf %127, %128 : vector<8x1xf32>
    %130 = vector.broadcast %129 : vector<8x1xf32> to vector<8x32xf32>
    %131 = arith.subf %125, %130 : vector<8x32xf32>
    %132 = arith.mulf %131, %131 : vector<8x32xf32>
    %cst_50 = arith.constant dense<0.000000e+00> : vector<8xf32>
    %133 = vector.multi_reduction <add>, %132, %cst_50 [1] : vector<8x32xf32> to vector<8xf32>
    %134 = vector.shape_cast %133 : vector<8xf32> to vector<8x1xf32>
    %cst_51 = arith.constant 3.200000e+01 : f32
    %135 = vector.broadcast %cst_51 : f32 to vector<8x1xf32>
    %136 = arith.divf %134, %135 : vector<8x1xf32>
    %137 = vector.broadcast %129 : vector<8x1xf32> to vector<8x32xf32>
    %138 = arith.subf %125, %137 : vector<8x32xf32>
    %cst_52 = arith.constant 9.99999996E-13 : f32
    %139 = vector.broadcast %cst_52 : f32 to vector<8x1xf32>
    %140 = arith.addf %136, %139 : vector<8x1xf32>
    %141 = math.rsqrt %140 : vector<8x1xf32>
    %142 = vector.broadcast %141 : vector<8x1xf32> to vector<8x32xf32>
    %143 = arith.mulf %138, %142 : vector<8x32xf32>
    %144 = vector.broadcast %8 : vector<1x32xf32> to vector<8x32xf32>
    %145 = arith.mulf %143, %144 : vector<8x32xf32>
    %146 = vector.broadcast %9 : vector<1x32xf32> to vector<8x32xf32>
    %147 = arith.addf %145, %146 : vector<8x32xf32>
    %c0_53 = arith.constant 0 : index
    %c0_54 = arith.constant 0 : index
    %c0_55 = arith.constant 0 : index
    %148 = vector.load %arg10[%c0_53, %c0_54, %c0_55] : memref<1x8x32xf32, #tpu.memory_space<vmem>>, vector<1x8x32xf32>
    %149 = vector.shape_cast %148 : vector<1x8x32xf32> to vector<8x32xf32>
    %150 = vector.shape_cast %147 : vector<8x32xf32> to vector<1x8x32xf32>
    tpu.vector_store %arg10[%c0_53, %c0_54, %c0_55], %150 {strides = array<i32>} : memref<1x8x32xf32, #tpu.memory_space<vmem>>, vector<1x8x32xf32>,
    return
  }
  func.func @transform_0(%arg0: i32, %arg1: i32) -> (i32, i32, i32) {
    %c0_i32 = arith.constant 0 : i32
    %c0_i32_0 = arith.constant 0 : i32
    %c0_i32_1 = arith.constant 0 : i32
    return %arg0, %c0_i32, %c0_i32_0 : i32, i32, i32
  }
  func.func @transform_1(%arg0: i32, %arg1: i32) -> (i32, i32, i32) {
    %c0_i32 = arith.constant 0 : i32
    %c0_i32_0 = arith.constant 0 : i32
    %c0_i32_1 = arith.constant 0 : i32
    return %arg0, %c0_i32, %c0_i32_0 : i32, i32, i32
  }
  func.func @transform_2(%arg0: i32, %arg1: i32) -> (i32, i32) {
    %c0_i32 = arith.constant 0 : i32
    %c0_i32_0 = arith.constant 0 : i32
    %c0_i32_1 = arith.constant 0 : i32
    return %c0_i32, %c0_i32_0 : i32, i32
  }
  func.func @transform_3(%arg0: i32, %arg1: i32) -> (i32, i32, i32) {
    %c0_i32 = arith.constant 0 : i32
    %c0_i32_0 = arith.constant 0 : i32
    %c0_i32_1 = arith.constant 0 : i32
    return %arg1, %c0_i32, %c0_i32_0 : i32, i32, i32
  }
  func.func @transform_4(%arg0: i32, %arg1: i32) -> (i32, i32, i32) {
    %c0_i32 = arith.constant 0 : i32
    %c0_i32_0 = arith.constant 0 : i32
    %c0_i32_1 = arith.constant 0 : i32
    return %arg1, %c0_i32, %c0_i32_0 : i32, i32, i32
  }
  func.func @transform_5(%arg0: i32, %arg1: i32) -> (i32, i32, i32) {
    %c0_i32 = arith.constant 0 : i32
    %c0_i32_0 = arith.constant 0 : i32
    %c0_i32_1 = arith.constant 0 : i32
    return %arg1, %c0_i32, %c0_i32_0 : i32, i32, i32
  }
  func.func @transform_6(%arg0: i32, %arg1: i32) -> (i32, i32, i32) {
    %c0_i32 = arith.constant 0 : i32
    %c0_i32_0 = arith.constant 0 : i32
    %c0_i32_1 = arith.constant 0 : i32
    return %arg1, %c0_i32, %c0_i32_0 : i32, i32, i32
  }
  func.func @transform_7(%arg0: i32, %arg1: i32) -> (i32, i32, i32) {
    %c0_i32 = arith.constant 0 : i32
    %c0_i32_0 = arith.constant 0 : i32
    %c0_i32_1 = arith.constant 0 : i32
    return %arg1, %c0_i32, %c0_i32_0 : i32, i32, i32
  }
  func.func @transform_8(%arg0: i32, %arg1: i32) -> (i32, i32, i32) {
    %c0_i32 = arith.constant 0 : i32
    %c0_i32_0 = arith.constant 0 : i32
    %c0_i32_1 = arith.constant 0 : i32
    return %arg0, %c0_i32, %c0_i32_0 : i32, i32, i32
  }
  func.func @transform_9(%arg0: i32, %arg1: i32) -> (i32, i32, i32) {
    %c0_i32 = arith.constant 0 : i32
    %c0_i32_0 = arith.constant 0 : i32
    %c0_i32_1 = arith.constant 0 : i32
    return %arg0, %c0_i32, %c0_i32_0 : i32, i32, i32
  }
}

</mosaic_0001>

<llo_original>
// kernel: transformer_forward.1
$region0: #{transformer_forward.1}
  #allocation0 [shape = 'u32[]', space=smem, size = 0x4, offset = 0x4, fixed_abs, tag = 'smem constant byte address 0x4 - core index']
  #allocation1 [shape = 'u32[144,128]{1,0:T(1,128)}', space=vmem, size = 0x12000, scoped, tag = 'internal scratch']
  %s0 = inlined_call_operand.vmem [shape: f32[2,8,32], index: 0, kind: input, shape index: {}]
  %s1 = inlined_call_operand.vmem [shape: f32[2,1,8], index: 1, kind: input, shape index: {}]
  %s2 = inlined_call_operand.vmem [shape: f32[2,32], index: 2, kind: input, shape index: {}]
  %s3 = inlined_call_operand.vmem [shape: bf16[2,32,96], index: 3, kind: input, shape index: {}]
  %s4 = inlined_call_operand.vmem [shape: bf16[2,32,32], index: 4, kind: input, shape index: {}]
  %s5 = inlined_call_operand.vmem [shape: bf16[2,32,64], index: 5, kind: input, shape index: {}]
  %s6 = inlined_call_operand.vmem [shape: bf16[2,64,32], index: 6, kind: input, shape index: {}]
  %s7 = inlined_call_operand.vmem [shape: f32[2,8,128], index: 7, kind: input, shape index: {}]
  %s8 = inlined_call_operand.hbm [shape: f32[2,8,32], index: 8, kind: output, shape index: {0}]
  %s9 = inlined_call_operand.hbm [shape: f32[2,16,8], index: 9, kind: output, shape index: {1}]
  %10 = xla_tuple %s8, %s9
  %s11 = sld [smem:[#allocation0]]
  $region77: #{transformer_forward.1} parent=0
    _
  %s13 = ssub.s32 1, %s11
  %s14 = scalar_select 0, %s13, %s11
  $region1: #{transformer_forward.1} parent=0
    #allocation2 [shape = 'u8[8192]{0}', space=vmem, size = 0x2000, scoped, tag = 'output window, operand 0']
    #allocation3 [shape = 's32[2]{0}', space=sflag, size = 0x8, scoped, tag = 'scoped memory for transformer_forward.1']
    #allocation4 [shape = 'u8[16384]{0}', space=vmem, size = 0x4000, scoped, tag = 'output window, operand 1']
    #allocation5 [shape = 's32[2]{0}', space=sflag, size = 0x8, scoped, tag = 'scoped memory for transformer_forward.1']
    %15 = vsyncpa [#allocation3], 0
    %s16 = scalar_lea.sflag [#allocation3], 1
    %17 = vsyncpa %s16, 0
    %18 = vsyncpa [#allocation5], 0
    %s19 = scalar_lea.sflag [#allocation5], 1
    %20 = vsyncpa %s19, 0
    loop: start=0, step=1, limit=6
    $region2: #{transformer_forward.1} parent=1 // loop_pre_header
      _
    $region3: #{transformer_forward.1} parent=1 // loop_header
      %s22 = sphi 0, %s26
      %p23 = scmp.ge.s32.totalorder %s22, 6
      %s29 = sphi 0, %s41
      %s30 = sphi 0, %s37
      %s31 = sphi 0, %s29
      %s32 = sphi 0, %s30
      %s33 = sphi 0, %s31
      %s34 = sphi 0, %s32
      %s44 = sphi 0, %s46
      %s47 = sphi 0, %s44
      %s48 = sphi 0, %s47
      %s64 = sphi 0, %s48
      %s70 = sphi 0, %s72
      %s73 = sphi 0, %s70
      %s74 = sphi 0, %s73
      %s90 = sphi 0, %s74
      %s94 = sphi 0, %s94
      %s96 = sphi 0, %s94
      %s97 = sphi 0, %s96
      %s111 = sphi 0, %s97
      %s117 = sphi 0, %s119
      %s120 = sphi 0, %s117
      %s121 = sphi 0, %s120
      %s137 = sphi 0, %s121
      %s143 = sphi 0, %s145
      %s146 = sphi 0, %s143
      %s147 = sphi 0, %s146
      %s163 = sphi 0, %s147
      %s169 = sphi 0, %s171
      %s172 = sphi 0, %s169
      %s173 = sphi 0, %s172
      %s189 = sphi 0, %s173
      %s195 = sphi 0, %s197
      %s198 = sphi 0, %s195
      %s199 = sphi 0, %s198
      %s215 = sphi 0, %s199
      %s221 = sphi 0, %s223
      %s224 = sphi 0, %s221
      %s225 = sphi 0, %s224
      %s241 = sphi 0, %s225
      %s247 = sphi 0, %s249
      %s250 = sphi 0, %s247
      %s251 = sphi 0, %s250
      %s267 = sphi 0, %s251
      %s273 = sphi 0, %s275
      %s276 = sphi 0, %s273
      %s277 = sphi 0, %s276
      %s293 = sphi 0, %s277
    $region4: #{transformer_forward.1} parent=1 // loop_header_branch
      %25 = sbr.rel (%p23) target = $region8
    $region5: #{transformer_forward.1} parent=1 // loop_body
      %s27 = ssub.s32 %s22, 1
      %s28 = ssub.s32 %s22, 2
      %s35 = sadd.s32 1, %s30
      %p36 = scmp.ge.s32.totalorder %s35, 2
      %s37 = scalar_select %p36, 0, %s35
      %s38 = sadd.s32 1, %s29
      %s39 = scalar_select %p36, %s38, %s29
      %p40 = scmp.ge.s32.totalorder %s39, 2
      %s41 = scalar_select %p40, 0, %s39
      %s42 = ssub.s32 %s29, %s41
      %p43 = scmp.eq.s32.totalorder %s42, 0
      %s45 = sadd.s32 %s44, 1
      %s46 = scalar_select %p43, %s44, %s45
      %p49 = pneg %p43
      %p50 = scmp.eq.s32.totalorder %s22, 3
      %p51 = por %p49, %p50
      %p52 = scmp.ne.s32.totalorder %s44, %s47
      %p53 = scmp.eq.s32.totalorder %s22, 0
      %p54 = por %p52, %p53
      %p55 = scmp.ne.s32.totalorder %s44, %s47
      %p56 = scmp.eq.s32.totalorder %s27, 3
      %p57 = por %p55, %p56
      %p58 = scmp.ne.s32.totalorder %s47, %s48
      %p59 = scmp.eq.s32.totalorder %s27, 0
      %p60 = por %p58, %p59
      %p61 = scmp.ne.s32.totalorder %s47, %s48
      %p62 = scmp.eq.s32.totalorder %s28, 3
      %p63 = por %p61, %p62
      %p65 = scmp.ne.s32.totalorder %s48, %s64
      %p66 = scmp.eq.s32.totalorder %s28, 0
      %p67 = por %p65, %p66
      %s68 = ssub.s32 %s29, %s41
      %p69 = scmp.eq.s32.totalorder %s68, 0
      %s71 = sadd.s32 %s70, 1
      %s72 = scalar_select %p69, %s70, %s71
      %p75 = pneg %p69
      %p76 = scmp.eq.s32.totalorder %s22, 3
      %p77 = por %p75, %p76
      %p78 = scmp.ne.s32.totalorder %s70, %s73
      %p79 = scmp.eq.s32.totalorder %s22, 0
      %p80 = por %p78, %p79
      %p81 = scmp.ne.s32.totalorder %s70, %s73
      %p82 = scmp.eq.s32.totalorder %s27, 3
      %p83 = por %p81, %p82
      %p84 = scmp.ne.s32.totalorder %s73, %s74
      %p85 = scmp.eq.s32.totalorder %s27, 0
      %p86 = por %p84, %p85
      %p87 = scmp.ne.s32.totalorder %s73, %s74
      %p88 = scmp.eq.s32.totalorder %s28, 3
      %p89 = por %p87, %p88
      %p91 = scmp.ne.s32.totalorder %s74, %s90
      %p92 = scmp.eq.s32.totalorder %s28, 0
      %p93 = por %p91, %p92
      %s95 = sadd.s32 %s94, 1
      %p98 = scmp.eq.s32.totalorder %s22, 3
      %p99 = scmp.ne.s32.totalorder %s94, %s96
      %p100 = scmp.eq.s32.totalorder %s22, 0
      %p101 = por %p99, %p100
      %p102 = scmp.ne.s32.totalorder %s94, %s96
      %p103 = scmp.eq.s32.totalorder %s27, 3
      %p104 = por %p102, %p103
      %p105 = scmp.ne.s32.totalorder %s96, %s97
      %p106 = scmp.eq.s32.totalorder %s27, 0
      %p107 = por %p105, %p106
      %p108 = scmp.ne.s32.totalorder %s96, %s97
      %p109 = scmp.eq.s32.totalorder %s28, 3
      %p110 = por %p108, %p109
      %p112 = scmp.ne.s32.totalorder %s97, %s111
      %p113 = scmp.eq.s32.totalorder %s28, 0
      %p114 = por %p112, %p113
      %s115 = ssub.s32 %s30, %s37
      %p116 = scmp.eq.s32.totalorder %s115, 0
      %s118 = sadd.s32 %s117, 1
      %s119 = scalar_select %p116, %s117, %s118
      %p122 = pneg %p116
      %p123 = scmp.eq.s32.totalorder %s22, 3
      %p124 = por %p122, %p123
      %p125 = scmp.ne.s32.totalorder %s117, %s120
      %p126 = scmp.eq.s32.totalorder %s22, 0
      %p127 = por %p125, %p126
      %p128 = scmp.ne.s32.totalorder %s117, %s120
      %p129 = scmp.eq.s32.totalorder %s27, 3
      %p130 = por %p128, %p129
      %p131 = scmp.ne.s32.totalorder %s120, %s121
      %p132 = scmp.eq.s32.totalorder %s27, 0
      %p133 = por %p131, %p132
      %p134 = scmp.ne.s32.totalorder %s120, %s121
      %p135 = scmp.eq.s32.totalorder %s28, 3
      %p136 = por %p134, %p135
      %p138 = scmp.ne.s32.totalorder %s121, %s137
      %p139 = scmp.eq.s32.totalorder %s28, 0
      %p140 = por %p138, %p139
      %s141 = ssub.s32 %s30, %s37
      %p142 = scmp.eq.s32.totalorder %s141, 0
      %s144 = sadd.s32 %s143, 1
      %s145 = scalar_select %p142, %s143, %s144
      %p148 = pneg %p142
      %p149 = scmp.eq.s32.totalorder %s22, 3
      %p150 = por %p148, %p149
      %p151 = scmp.ne.s32.totalorder %s143, %s146
      %p152 = scmp.eq.s32.totalorder %s22, 0
      %p153 = por %p151, %p152
      %p154 = scmp.ne.s32.totalorder %s143, %s146
      %p155 = scmp.eq.s32.totalorder %s27, 3
      %p156 = por %p154, %p155
      %p157 = scmp.ne.s32.totalorder %s146, %s147
      %p158 = scmp.eq.s32.totalorder %s27, 0
      %p159 = por %p157, %p158
      %p160 = scmp.ne.s32.totalorder %s146, %s147
      %p161 = scmp.eq.s32.totalorder %s28, 3
      %p162 = por %p160, %p161
      %p164 = scmp.ne.s32.totalorder %s147, %s163
      %p165 = scmp.eq.s32.totalorder %s28, 0
      %p166 = por %p164, %p165
      %s167 = ssub.s32 %s30, %s37
      %p168 = scmp.eq.s32.totalorder %s167, 0
      %s170 = sadd.s32 %s169, 1
      %s171 = scalar_select %p168, %s169, %s170
      %p174 = pneg %p168
      %p175 = scmp.eq.s32.totalorder %s22, 3
      %p176 = por %p174, %p175
      %p177 = scmp.ne.s32.totalorder %s169, %s172
      %p178 = scmp.eq.s32.totalorder %s22, 0
      %p179 = por %p177, %p178
      %p180 = scmp.ne.s32.totalorder %s169, %s172
      %p181 = scmp.eq.s32.totalorder %s27, 3
      %p182 = por %p180, %p181
      %p183 = scmp.ne.s32.totalorder %s172, %s173
      %p184 = scmp.eq.s32.totalorder %s27, 0
      %p185 = por %p183, %p184
      %p186 = scmp.ne.s32.totalorder %s172, %s173
      %p187 = scmp.eq.s32.totalorder %s28, 3
      %p188 = por %p186, %p187
      %p190 = scmp.ne.s32.totalorder %s173, %s189
      %p191 = scmp.eq.s32.totalorder %s28, 0
      %p192 = por %p190, %p191
      %s193 = ssub.s32 %s30, %s37
      %p194 = scmp.eq.s32.totalorder %s193, 0
      %s196 = sadd.s32 %s195, 1
      %s197 = scalar_select %p194, %s195, %s196
      %p200 = pneg %p194
      %p201 = scmp.eq.s32.totalorder %s22, 3
      %p202 = por %p200, %p201
      %p203 = scmp.ne.s32.totalorder %s195, %s198
      %p204 = scmp.eq.s32.totalorder %s22, 0
      %p205 = por %p203, %p204
      %p206 = scmp.ne.s32.totalorder %s195, %s198
      %p207 = scmp.eq.s32.totalorder %s27, 3
      %p208 = por %p206, %p207
      %p209 = scmp.ne.s32.totalorder %s198, %s199
      %p210 = scmp.eq.s32.totalorder %s27, 0
      %p211 = por %p209, %p210
      %p212 = scmp.ne.s32.totalorder %s198, %s199
      %p213 = scmp.eq.s32.totalorder %s28, 3
      %p214 = por %p212, %p213
      %p216 = scmp.ne.s32.totalorder %s199, %s215
      %p217 = scmp.eq.s32.totalorder %s28, 0
      %p218 = por %p216, %p217
      %s219 = ssub.s32 %s30, %s37
      %p220 = scmp.eq.s32.totalorder %s219, 0
      %s222 = sadd.s32 %s221, 1
      %s223 = scalar_select %p220, %s221, %s222
      %p226 = pneg %p220
      %p227 = scmp.eq.s32.totalorder %s22, 3
      %p228 = por %p226, %p227
      %p229 = scmp.ne.s32.totalorder %s221, %s224
      %p230 = scmp.eq.s32.totalorder %s22, 0
      %p231 = por %p229, %p230
      %p232 = scmp.ne.s32.totalorder %s221, %s224
      %p233 = scmp.eq.s32.totalorder %s27, 3
      %p234 = por %p232, %p233
      %p235 = scmp.ne.s32.totalorder %s224, %s225
      %p236 = scmp.eq.s32.totalorder %s27, 0
      %p237 = por %p235, %p236
      %p238 = scmp.ne.s32.totalorder %s224, %s225
      %p239 = scmp.eq.s32.totalorder %s28, 3
      %p240 = por %p238, %p239
      %p242 = scmp.ne.s32.totalorder %s225, %s241
      %p243 = scmp.eq.s32.totalorder %s28, 0
      %p244 = por %p242, %p243
      %s245 = ssub.s32 %s29, %s41
      %p246 = scmp.eq.s32.totalorder %s245, 0
      %s248 = sadd.s32 %s247, 1
      %s249 = scalar_select %p246, %s247, %s248
      %p252 = pneg %p246
      %p253 = scmp.eq.s32.totalorder %s22, 3
      %p254 = por %p252, %p253
      %p255 = scmp.ne.s32.totalorder %s247, %s250
      %p256 = scmp.eq.s32.totalorder %s22, 0
      %p257 = por %p255, %p256
      %p258 = scmp.ne.s32.totalorder %s247, %s250
      %p259 = scmp.eq.s32.totalorder %s27, 3
      %p260 = por %p258, %p259
      %p261 = scmp.ne.s32.totalorder %s250, %s251
      %p262 = scmp.eq.s32.totalorder %s27, 0
      %p263 = por %p261, %p262
      %p264 = scmp.ne.s32.totalorder %s250, %s251
      %p265 = scmp.eq.s32.totalorder %s28, 3
      %p266 = por %p264, %p265
      %p268 = scmp.ne.s32.totalorder %s251, %s267
      %p269 = scmp.eq.s32.totalorder %s28, 0
      %p270 = por %p268, %p269
      %s271 = ssub.s32 %s29, %s41
      %p272 = scmp.eq.s32.totalorder %s271, 0
      %s274 = sadd.s32 %s273, 1
      %s275 = scalar_select %p272, %s273, %s274
      %p278 = pneg %p272
      %p279 = scmp.eq.s32.totalorder %s22, 3
      %p280 = por %p278, %p279
      %p281 = scmp.ne.s32.totalorder %s273, %s276
      %p282 = scmp.eq.s32.totalorder %s22, 0
      %p283 = por %p281, %p282
      %p284 = scmp.ne.s32.totalorder %s273, %s276
      %p285 = scmp.eq.s32.totalorder %s27, 3
      %p286 = por %p284, %p285
      %p287 = scmp.ne.s32.totalorder %s276, %s277
      %p288 = scmp.eq.s32.totalorder %s27, 0
      %p289 = por %p287, %p288
      %p290 = scmp.ne.s32.totalorder %s276, %s277
      %p291 = scmp.eq.s32.totalorder %s28, 3
      %p292 = por %p290, %p291
      %p294 = scmp.ne.s32.totalorder %s277, %s293
      %p295 = scmp.eq.s32.totalorder %s28, 0
      %p296 = por %p294, %p295
      %p297 = scmp.le.s32.totalorder 1, %s22
      %p298 = scmp.lt.s32.totalorder %s22, 5
      %p299 = pnand %p297, %p298
      %p300 = pneg %p299
      // Predicated region
      $region9: #{transformer_forward.1} parent=5 // pred_check
        _
      $region10: #{transformer_forward.1} parent=5 // pred_check_branch
        %302 = sbr.rel (%p299) target = $region12
      $region11: #{transformer_forward.1} parent=5 // pred_region
        %s303 = ssub.s32 %s22, 1
        // Predicated region
        $region13: #{transformer_forward.1} parent=11 // pred_check
          %p304 = pneg %p107
        $region14: #{transformer_forward.1} parent=11 // pred_check_branch
          %306 = sbr.rel (%p304) target = $region16
        $region15: #{transformer_forward.1} parent=11 // pred_region
          _
        $region16: #{transformer_forward.1} parent=11 // pred_fallthru
          _
      $region12: #{transformer_forward.1} parent=5 // pred_fallthru
        _
      %p307 = scmp.lt.s32.totalorder %s22, 4
      // Predicated region
      $region17: #{transformer_forward.1} parent=5 // pred_check
        %p308 = pneg %p307
      $region18: #{transformer_forward.1} parent=5 // pred_check_branch
        %310 = sbr.rel (%p308) target = $region20
      $region19: #{transformer_forward.1} parent=5 // pred_region
        // Predicated region
        $region21: #{transformer_forward.1} parent=19 // pred_check
          %p311 = pneg %p54
        $region22: #{transformer_forward.1} parent=19 // pred_check_branch
          %313 = sbr.rel (%p311) target = $region24
        $region23: #{transformer_forward.1} parent=19 // pred_region
          %p314 = scmp.lt.s32.totalorder %s29, 1
          %s315 = scalar_select %p314, %s29, 1
          %s316 = smul.addr %s315, 8
          %s317 = scalar_lea.vmem %s0, %s316
        $region24: #{transformer_forward.1} parent=19 // pred_fallthru
          _
        // Predicated region
        $region25: #{transformer_forward.1} parent=19 // pred_check
          %p318 = pneg %p80
        $region26: #{transformer_forward.1} parent=19 // pred_check_branch
          %320 = sbr.rel (%p318) target = $region28
        $region27: #{transformer_forward.1} parent=19 // pred_region
          %p321 = scmp.lt.s32.totalorder %s29, 1
          %s322 = scalar_select %p321, %s29, 1
          %s323 = scalar_lea.vmem %s1, %s322
        $region28: #{transformer_forward.1} parent=19 // pred_fallthru
          _
        // Predicated region
        $region29: #{transformer_forward.1} parent=19 // pred_check
          %p324 = pneg %p127
        $region30: #{transformer_forward.1} parent=19 // pred_check_branch
          %326 = sbr.rel (%p324) target = $region32
        $region31: #{transformer_forward.1} parent=19 // pred_region
          %p327 = scmp.lt.s32.totalorder %s30, 1
          %s328 = scalar_select %p327, %s30, 1
          %s329 = smul.addr %s328, 4
          %s330 = smul.addr %s329, 4
          %s331 = scalar_lea.vmem %s3, %s330
        $region32: #{transformer_forward.1} parent=19 // pred_fallthru
          _
        // Predicated region
        $region33: #{transformer_forward.1} parent=19 // pred_check
          %p332 = pneg %p153
        $region34: #{transformer_forward.1} parent=19 // pred_check_branch
          %334 = sbr.rel (%p332) target = $region36
        $region35: #{transformer_forward.1} parent=19 // pred_region
          %p335 = scmp.lt.s32.totalorder %s30, 1
          %s336 = scalar_select %p335, %s30, 1
          %s337 = smul.addr %s336, 4
          %s338 = smul.addr %s337, 4
          %s339 = scalar_lea.vmem %s4, %s338
        $region36: #{transformer_forward.1} parent=19 // pred_fallthru
          _
        // Predicated region
        $region37: #{transformer_forward.1} parent=19 // pred_check
          %p340 = pneg %p179
        $region38: #{transformer_forward.1} parent=19 // pred_check_branch
          %342 = sbr.rel (%p340) target = $region40
        $region39: #{transformer_forward.1} parent=19 // pred_region
          %p343 = scmp.lt.s32.totalorder %s30, 1
          %s344 = scalar_select %p343, %s30, 1
          %s345 = smul.addr %s344, 4
          %s346 = smul.addr %s345, 4
          %s347 = scalar_lea.vmem %s5, %s346
        $region40: #{transformer_forward.1} parent=19 // pred_fallthru
          _
        // Predicated region
        $region41: #{transformer_forward.1} parent=19 // pred_check
          %p348 = pneg %p205
        $region42: #{transformer_forward.1} parent=19 // pred_check_branch
          %350 = sbr.rel (%p348) target = $region44
        $region43: #{transformer_forward.1} parent=19 // pred_region
          %p351 = scmp.lt.s32.totalorder %s30, 1
          %s352 = scalar_select %p351, %s30, 1
          %s353 = smul.addr %s352, 8
          %s354 = smul.addr %s353, 4
          %s355 = scalar_lea.vmem %s6, %s354
        $region44: #{transformer_forward.1} parent=19 // pred_fallthru
          _
        // Predicated region
        $region45: #{transformer_forward.1} parent=19 // pred_check
          %p356 = pneg %p231
        $region46: #{transformer_forward.1} parent=19 // pred_check_branch
          %358 = sbr.rel (%p356) target = $region48
        $region47: #{transformer_forward.1} parent=19 // pred_region
          %p359 = scmp.lt.s32.totalorder %s30, 1
          %s360 = scalar_select %p359, %s30, 1
          %s361 = smul.addr %s360, 8
          %s362 = scalar_lea.vmem %s7, %s361
        $region48: #{transformer_forward.1} parent=19 // pred_fallthru
          _
      $region20: #{transformer_forward.1} parent=5 // pred_fallthru
        _
      %p363 = scmp.le.s32.totalorder 1, %s22
      %p364 = scmp.lt.s32.totalorder %s22, 5
      %p365 = pnand %p363, %p364
      %p366 = pneg %p365
      // Predicated region
      $region49: #{transformer_forward.1} parent=5 // pred_check
        _
      $region50: #{transformer_forward.1} parent=5 // pred_check_branch
        %368 = sbr.rel (%p365) target = $region52
      $region51: #{transformer_forward.1} parent=5 // pred_region
        %s369 = ssub.s32 %s22, 1
        %p370 = scmp.lt.s32.totalorder %s31, 1
        %s371 = scalar_select %p370, %s31, 1
        %s372 = smul.addr %s371, 8
        %s373 = scalar_lea.vmem %s0, %s372
        %p374 = pneg %p60
        %p375 = pneg %p57
        %p376 = scmp.lt.s32.totalorder %s31, 1
        %s377 = scalar_select %p376, %s31, 1
        %s378 = scalar_lea.vmem %s1, %s377
        %p379 = pneg %p86
        %p380 = pneg %p83
        %p381 = pneg %p107
        %p382 = pneg %p104
        %p383 = scmp.lt.s32.totalorder %s32, 1
        %s384 = scalar_select %p383, %s32, 1
        %s385 = smul.addr %s384, 4
        %s386 = smul.addr %s385, 4
        %s387 = scalar_lea.vmem %s3, %s386
        %p388 = pneg %p133
        %p389 = pneg %p130
        %p390 = scmp.lt.s32.totalorder %s32, 1
        %s391 = scalar_select %p390, %s32, 1
        %s392 = smul.addr %s391, 4
        %s393 = smul.addr %s392, 4
        %s394 = scalar_lea.vmem %s4, %s393
        %p395 = pneg %p159
        %p396 = pneg %p156
        %p397 = scmp.lt.s32.totalorder %s32, 1
        %s398 = scalar_select %p397, %s32, 1
        %s399 = smul.addr %s398, 4
        %s400 = smul.addr %s399, 4
        %s401 = scalar_lea.vmem %s5, %s400
        %p402 = pneg %p185
        %p403 = pneg %p182
        %p404 = scmp.lt.s32.totalorder %s32, 1
        %s405 = scalar_select %p404, %s32, 1
        %s406 = smul.addr %s405, 8
        %s407 = smul.addr %s406, 4
        %s408 = scalar_lea.vmem %s6, %s407
        %p409 = pneg %p211
        %p410 = pneg %p208
        %p411 = scmp.lt.s32.totalorder %s32, 1
        %s412 = scalar_select %p411, %s32, 1
        %s413 = smul.addr %s412, 8
        %s414 = scalar_lea.vmem %s7, %s413
        %p415 = pneg %p237
        %p416 = pneg %p234
        %p417 = pneg %p263
        %p418 = pneg %p260
        %s419 = sand.u32 %s250, 1
        %s420 = scalar_lea.sflag [#allocation3], %s419
        %s421 = sand.u32 %s250, 1
        %s422 = smul.addr %s421, 8
        %s423 = scalar_lea.vmem [#allocation2], %s422
        %p424 = pneg %p289
        %p425 = pneg %p286
        %s426 = sand.u32 %s276, 1
        %s427 = scalar_lea.sflag [#allocation5], %s426
        %s428 = sand.u32 %s276, 1
        %s429 = smul.addr %s428, 16
        %s430 = scalar_lea.vmem [#allocation4], %s429
        %p431 = scmp.lt.s32.totalorder %s31, 1
        %s432 = scalar_select %p431, %s31, 1
        %s433 = smul.addr %s432, 8
        %s434 = scalar_lea.vmem %s0, %s433
        %p435 = scmp.lt.s32.totalorder %s31, 1
        %s436 = scalar_select %p435, %s31, 1
        %s437 = scalar_lea.vmem %s1, %s436
        %p438 = scmp.lt.s32.totalorder %s32, 1
        %s439 = scalar_select %p438, %s32, 1
        %s440 = smul.addr %s439, 4
        %s441 = smul.addr %s440, 4
        %s442 = scalar_lea.vmem %s3, %s441
        %p443 = scmp.lt.s32.totalorder %s32, 1
        %s444 = scalar_select %p443, %s32, 1
        %s445 = smul.addr %s444, 4
        %s446 = smul.addr %s445, 4
        %s447 = scalar_lea.vmem %s4, %s446
        %p448 = scmp.lt.s32.totalorder %s32, 1
        %s449 = scalar_select %p448, %s32, 1
        %s450 = smul.addr %s449, 4
        %s451 = smul.addr %s450, 4
        %s452 = scalar_lea.vmem %s5, %s451
        %p453 = scmp.lt.s32.totalorder %s32, 1
        %s454 = scalar_select %p453, %s32, 1
        %s455 = smul.addr %s454, 8
        %s456 = smul.addr %s455, 4
        %s457 = scalar_lea.vmem %s6, %s456
        %p458 = scmp.lt.s32.totalorder %s32, 1
        %s459 = scalar_select %p458, %s32, 1
        %s460 = smul.addr %s459, 8
        %s461 = scalar_lea.vmem %s7, %s460
        %v463 = vld [vmem:[%s461] sm:$0xff]
        %p464 = scmp.eq.s32.totalorder %s32, 0
        // Predicated region
        $region53: #{transformer_forward.1} parent=51 // pred_check
          %p465 = pneg %p464
        $region54: #{transformer_forward.1} parent=51 // pred_check_branch
          %467 = sbr.rel (%p465) target = $region56
        $region55: #{transformer_forward.1} parent=51 // pred_region
          %v468 = vld [vmem:[%s2] sm:$0x3]
          %v469 = vld [vmem:[%s434] sm:$0xff]
          %vm470 = vcmask 261120
          %v471 = vsel %vm470, %v469, 0.0
          %472 = vadd.xlane.f32.xlu0 %v471
          %v473 = vpop.xlane.xlu0 %472
          %v474 = vrcp.pop 32.0
          %v475 = vmul.f32 %v473, %v474
          %v476 = vsub.f32 %v469, %v475
          %v477 = vmul.f32 %v476, %v476
          %v478 = vsel %vm470, %v477, 0.0
          %479 = vadd.xlane.f32.xlu0 %v478
          %v480 = vpop.xlane.xlu0 %479
          %v481 = vmul.f32 %v480, %v474
          %v482 = vadd.f32 %v481, 1e-12
          %v483 = vrsqrt.pop %v482
          %v484 = vmul.f32 %v476, %v483
          %v485 = vlaneseq
          %v486 = vshrl.u32 %v485, 7
          %v487 = vsub.s32 0, %v486
          %v488 = vrot.slane %v468, %v487
          %v489 = vmul.f32 %v484, %v488
          %v490 = vlaneseq
          %v491 = vshrl.u32 %v490, 7
          %v492 = vsub.s32 1, %v491
          %v493 = vrot.slane %v468, %v492
          %v494 = vadd.f32 %v489, %v493
          %495 = vst.msk [vmem:[%s423] sm:$0xff] %vm470, %v494
        $region56: #{transformer_forward.1} parent=51 // pred_fallthru
          _
        %v496 = vld [vmem:[%s423] sm:$0xff]
        %v497 = vpack.c.bf16 %v496, %v496
        %v498 = vld [vmem:[%s442] sm:$0xf]
        %v499 = vld [vmem:[%s442 + $0x4] sm:$0xf]
        %v500 = vld [vmem:[%s442 + $0x8] sm:$0xf]
        %v501 = vld [vmem:[%s442 + $0xc] sm:$0xf]
        %v502 = vlaneseq
        %v503 = vshrl.u32 %v502, 7
        %v504 = vsub.s32 0, %v503
        %v505 = vrot.slane %v463, %v504
        %v510 = vunpack.c.l.b16 %v498
        %v511 = vunpack.c.l.b16 %v499
        %v512 = vunpack.c.l.b16 %v500
        %v513 = vunpack.c.l.b16 %v501
        %v514 = vpack.c.b16 %v511, %v510
        %v515 = vpack.c.b16 %v513, %v512
        %vm518 = vcmask 261120
        %v520 = vsel %vm518, %v497, 0
        %522 = vmatprep.subr.bf16.mxu0 0
        %523 = vmatpush1.bf16.msra.mxu0 %v514
        %524 = vmatprep.subr.bf16.mxu0 0
        %525 = vmatpush1.bf16.msra.mxu0 %v515
        %526 = vmatprep.subr.bf16.mxu0 0
        %527 = vmatpush1.bf16.msra.mxu0 0
        %528 = vmatprep.subr.bf16.mxu0 0
        %529 = vmatpush1.bf16.msra.mxu0 0
        %530 = vmatprep.subr.bf16.mxu0 0
        %531 = vmatpush1.bf16.msra.mxu0 0
        %532 = vmatprep.subr.bf16.mxu0 0
        %533 = vmatpush1.bf16.msra.mxu0 0
        %534 = vmatprep.subr.bf16.mxu0 0
        %535 = vmatpush1.bf16.msra.mxu0 0
        %536 = vmatprep.subr.bf16.mxu0 0
        %537 = vmatpush1.bf16.msra.mxu0 0
        %538 = vmatprep.subr.bf16.mxu0 0
        %539 = vmatpush1.bf16.msra.mxu0 0
        %540 = vmatprep.subr.bf16.mxu0 0
        %541 = vmatpush1.bf16.msra.mxu0 0
        %542 = vmatprep.subr.bf16.mxu0 0
        %543 = vmatpush1.bf16.msra.mxu0 0
        %544 = vmatprep.subr.bf16.mxu0 0
        %545 = vmatpush1.bf16.msra.mxu0 0
        %546 = vmatprep.subr.bf16.mxu0 0
        %547 = vmatpush1.bf16.msra.mxu0 0
        %548 = vmatprep.subr.bf16.mxu0 0
        %549 = vmatpush1.bf16.msra.mxu0 0
        %550 = vmatprep.subr.bf16.mxu0 0
        %551 = vmatpush1.bf16.msra.mxu0 0
        %552 = vmatprep.subr.bf16.mxu0 0
        %553 = vmatpush1.bf16.msra.mxu0 0
        %554 = vmatprep.mubr.bf16.mxu0 0
        %555 = vmatmul.mubr.bf16.gmra.mrb[0].mxu0 %v520
        %v556 = vpop.f32.mrb[0].mxu0
        %v557 = vadd.f32 %v505, %v556
        %v558 = vpop.f32.mrb[0].mxu0
        %v559 = vpop.f32.mrb[0].mxu0
        %v560 = vpop.f32.mrb[0].mxu0
        %561 = vdwg.mxu0
        %v562 = vpack.c.bf16 %v557, %v557
        %v563 = vld [vmem:[%s437] sm:$0x1]
        %565 = vrot.lane.b32.xlu0 %v562, 96
        %v566 = vpop.permute.xlu0 %565
        %vm567 = vcmask 130048
        %v569 = vsel %vm567, %v562, 0
        %v572 = vsel %vm567, %v566, 0
        %574 = vmatprep.subr.bf16.mxu0 0
        %575 = vmatpush1.bf16.xpose.msra.mxu0 %v572
        %576 = vmatprep.subr.bf16.mxu0 0
        %577 = vmatpush1.bf16.xpose.msra.mxu0 0
        %578 = vmatprep.subr.bf16.mxu0 0
        %579 = vmatpush1.bf16.xpose.msra.mxu0 0
        %580 = vmatprep.subr.bf16.mxu0 0
        %581 = vmatpush1.bf16.xpose.msra.mxu0 0
        %582 = vmatprep.subr.bf16.mxu0 0
        %583 = vmatpush1.bf16.xpose.msra.mxu0 0
        %584 = vmatprep.subr.bf16.mxu0 0
        %585 = vmatpush1.bf16.xpose.msra.mxu0 0
        %586 = vmatprep.subr.bf16.mxu0 0
        %587 = vmatpush1.bf16.xpose.msra.mxu0 0
        %588 = vmatprep.subr.bf16.mxu0 0
        %589 = vmatpush1.bf16.xpose.msra.mxu0 0
        %590 = vmatprep.subr.bf16.mxu0 0
        %591 = vmatpush1.bf16.xpose.msra.mxu0 0
        %592 = vmatprep.subr.bf16.mxu0 0
        %593 = vmatpush1.bf16.xpose.msra.mxu0 0
        %594 = vmatprep.subr.bf16.mxu0 0
        %595 = vmatpush1.bf16.xpose.msra.mxu0 0
        %596 = vmatprep.subr.bf16.mxu0 0
        %597 = vmatpush1.bf16.xpose.msra.mxu0 0
        %598 = vmatprep.subr.bf16.mxu0 0
        %599 = vmatpush1.bf16.xpose.msra.mxu0 0
        %600 = vmatprep.subr.bf16.mxu0 0
        %601 = vmatpush1.bf16.xpose.msra.mxu0 0
        %602 = vmatprep.subr.bf16.mxu0 0
        %603 = vmatpush1.bf16.xpose.msra.mxu0 0
        %604 = vmatprep.subr.bf16.mxu0 0
        %605 = vmatpush1.bf16.xpose.msra.mxu0 0
        %606 = vmatprep.mubr.bf16.mxu0 0
        %607 = vmatmul.mubr.bf16.gmra.mrb[0].mxu0 %v569
        %v608 = vpop.f32.mrb[0].mxu0
        %v609 = vadd.f32 0.0, %v608
        %v610 = vpop.f32.mrb[0].mxu0
        %v611 = vpop.f32.mrb[0].mxu0
        %v612 = vpop.f32.mrb[0].mxu0
        %613 = vdwg.mxu0
        %v614 = vmul.f32 %v609, 0.25
        %v616 = vlaneseq
        %v617 = vshrl.u32 %v616, 7
        %v618 = vsub.s32 0, %v617
        %v619 = vrot.slane %v563, %v618
        %v621 = vadd.f32 %v614, %v619
        %vm622 = vcmask 64512
        %v623 = vsel %vm622, %v621, -inf
        %624 = vmax.xlane.f32.xlu0 %v623
        %v625 = vpop.xlane.xlu0 %624
        %v626 = vsub.f32 %v621, %v625
        %v627 = vmul.f32 %v626, 1.442695
        %v628 = vpow.pop %v627
        %v629 = vsel %vm622, %v628, 0.0
        %630 = vadd.xlane.f32.xlu0 %v629
        %v631 = vpop.xlane.xlu0 %630
        %v632 = vrcp.pop %v631
        %v633 = vmul.f32 %v628, %v632
        %634 = vst.msk [vmem:[%s430] sm:$0xff] %vm622, %v633
        %v635 = vpack.c.bf16 %v633, %v633
        %636 = vrot.lane.b32.xlu0 %v562, 64
        %v637 = vpop.permute.xlu0 %636
        %v639 = vsel %vm622, %v635, 0
        %vm641 = vcmask 1043456
        %v643 = vsel %vm641, %v637, 0
        %645 = vmatprep.subr.bf16.mxu0 0
        %646 = vmatpush1.bf16.msra.mxu0 %v643
        %647 = vmatprep.subr.bf16.mxu0 0
        %648 = vmatpush1.bf16.msra.mxu0 0
        %649 = vmatprep.subr.bf16.mxu0 0
        %650 = vmatpush1.bf16.msra.mxu0 0
        %651 = vmatprep.subr.bf16.mxu0 0
        %652 = vmatpush1.bf16.msra.mxu0 0
        %653 = vmatprep.subr.bf16.mxu0 0
        %654 = vmatpush1.bf16.msra.mxu0 0
        %655 = vmatprep.subr.bf16.mxu0 0
        %656 = vmatpush1.bf16.msra.mxu0 0
        %657 = vmatprep.subr.bf16.mxu0 0
        %658 = vmatpush1.bf16.msra.mxu0 0
        %659 = vmatprep.subr.bf16.mxu0 0
        %660 = vmatpush1.bf16.msra.mxu0 0
        %661 = vmatprep.subr.bf16.mxu0 0
        %662 = vmatpush1.bf16.msra.mxu0 0
        %663 = vmatprep.subr.bf16.mxu0 0
        %664 = vmatpush1.bf16.msra.mxu0 0
        %665 = vmatprep.subr.bf16.mxu0 0
        %666 = vmatpush1.bf16.msra.mxu0 0
        %667 = vmatprep.subr.bf16.mxu0 0
        %668 = vmatpush1.bf16.msra.mxu0 0
        %669 = vmatprep.subr.bf16.mxu0 0
        %670 = vmatpush1.bf16.msra.mxu0 0
        %671 = vmatprep.subr.bf16.mxu0 0
        %672 = vmatpush1.bf16.msra.mxu0 0
        %673 = vmatprep.subr.bf16.mxu0 0
        %674 = vmatpush1.bf16.msra.mxu0 0
        %675 = vmatprep.subr.bf16.mxu0 0
        %676 = vmatpush1.bf16.msra.mxu0 0
        %677 = vmatprep.mubr.bf16.mxu0 0
        %678 = vmatmul.mubr.bf16.gmra.mrb[0].mxu0 %v639
        %v679 = vpop.f32.mrb[0].mxu0
        %v680 = vadd.f32 0.0, %v679
        %v681 = vpop.f32.mrb[0].mxu0
        %v682 = vpop.f32.mrb[0].mxu0
        %v683 = vpop.f32.mrb[0].mxu0
        %684 = vdwg.mxu0
        %685 = vrot.lane.b32.xlu0 %v562, 112
        %v686 = vpop.permute.xlu0 %685
        %687 = vrot.lane.b32.xlu0 %v562, 80
        %v688 = vpop.permute.xlu0 %687
        %v690 = vsel %vm567, %v686, 0
        %v693 = vsel %vm567, %v688, 0
        %695 = vmatprep.subr.bf16.mxu0 0
        %696 = vmatpush1.bf16.xpose.msra.mxu0 %v693
        %697 = vmatprep.subr.bf16.mxu0 0
        %698 = vmatpush1.bf16.xpose.msra.mxu0 0
        %699 = vmatprep.subr.bf16.mxu0 0
        %700 = vmatpush1.bf16.xpose.msra.mxu0 0
        %701 = vmatprep.subr.bf16.mxu0 0
        %702 = vmatpush1.bf16.xpose.msra.mxu0 0
        %703 = vmatprep.subr.bf16.mxu0 0
        %704 = vmatpush1.bf16.xpose.msra.mxu0 0
        %705 = vmatprep.subr.bf16.mxu0 0
        %706 = vmatpush1.bf16.xpose.msra.mxu0 0
        %707 = vmatprep.subr.bf16.mxu0 0
        %708 = vmatpush1.bf16.xpose.msra.mxu0 0
        %709 = vmatprep.subr.bf16.mxu0 0
        %710 = vmatpush1.bf16.xpose.msra.mxu0 0
        %711 = vmatprep.subr.bf16.mxu0 0
        %712 = vmatpush1.bf16.xpose.msra.mxu0 0
        %713 = vmatprep.subr.bf16.mxu0 0
        %714 = vmatpush1.bf16.xpose.msra.mxu0 0
        %715 = vmatprep.subr.bf16.mxu0 0
        %716 = vmatpush1.bf16.xpose.msra.mxu0 0
        %717 = vmatprep.subr.bf16.mxu0 0
        %718 = vmatpush1.bf16.xpose.msra.mxu0 0
        %719 = vmatprep.subr.bf16.mxu0 0
        %720 = vmatpush1.bf16.xpose.msra.mxu0 0
        %721 = vmatprep.subr.bf16.mxu0 0
        %722 = vmatpush1.bf16.xpose.msra.mxu0 0
        %723 = vmatprep.subr.bf16.mxu0 0
        %724 = vmatpush1.bf16.xpose.msra.mxu0 0
        %725 = vmatprep.subr.bf16.mxu0 0
        %726 = vmatpush1.bf16.xpose.msra.mxu0 0
        %727 = vmatprep.mubr.bf16.mxu0 0
        %728 = vmatmul.mubr.bf16.gmra.mrb[0].mxu0 %v690
        %v729 = vpop.f32.mrb[0].mxu0
        %v730 = vadd.f32 0.0, %v729
        %v731 = vpop.f32.mrb[0].mxu0
        %v732 = vpop.f32.mrb[0].mxu0
        %v733 = vpop.f32.mrb[0].mxu0
        %734 = vdwg.mxu0
        %v735 = vmul.f32 %v730, 0.25
        %v736 = vadd.f32 %v735, %v619
        %v737 = vsel %vm622, %v736, -inf
        %738 = vmax.xlane.f32.xlu0 %v737
        %v739 = vpop.xlane.xlu0 %738
        %v740 = vsub.f32 %v736, %v739
        %v741 = vmul.f32 %v740, 1.442695
        %v742 = vpow.pop %v741
        %v743 = vsel %vm622, %v742, 0.0
        %744 = vadd.xlane.f32.xlu0 %v743
        %v745 = vpop.xlane.xlu0 %744
        %v746 = vrcp.pop %v745
        %v747 = vmul.f32 %v742, %v746
        %748 = vst.msk [vmem:[%s430 + $0x8] sm:$0xff] %vm622, %v747
        %v749 = vpack.c.bf16 %v747, %v747
        %750 = vrot.lane.b32.xlu0 %v562, 48
        %v751 = vpop.permute.xlu0 %750
        %v753 = vsel %vm622, %v749, 0
        %v756 = vsel %vm641, %v751, 0
        %758 = vmatprep.subr.bf16.mxu0 0
        %759 = vmatpush1.bf16.msra.mxu0 %v756
        %760 = vmatprep.subr.bf16.mxu0 0
        %761 = vmatpush1.bf16.msra.mxu0 0
        %762 = vmatprep.subr.bf16.mxu0 0
        %763 = vmatpush1.bf16.msra.mxu0 0
        %764 = vmatprep.subr.bf16.mxu0 0
        %765 = vmatpush1.bf16.msra.mxu0 0
        %766 = vmatprep.subr.bf16.mxu0 0
        %767 = vmatpush1.bf16.msra.mxu0 0
        %768 = vmatprep.subr.bf16.mxu0 0
        %769 = vmatpush1.bf16.msra.mxu0 0
        %770 = vmatprep.subr.bf16.mxu0 0
        %771 = vmatpush1.bf16.msra.mxu0 0
        %772 = vmatprep.subr.bf16.mxu0 0
        %773 = vmatpush1.bf16.msra.mxu0 0
        %774 = vmatprep.subr.bf16.mxu0 0
        %775 = vmatpush1.bf16.msra.mxu0 0
        %776 = vmatprep.subr.bf16.mxu0 0
        %777 = vmatpush1.bf16.msra.mxu0 0
        %778 = vmatprep.subr.bf16.mxu0 0
        %779 = vmatpush1.bf16.msra.mxu0 0
        %780 = vmatprep.subr.bf16.mxu0 0
        %781 = vmatpush1.bf16.msra.mxu0 0
        %782 = vmatprep.subr.bf16.mxu0 0
        %783 = vmatpush1.bf16.msra.mxu0 0
        %784 = vmatprep.subr.bf16.mxu0 0
        %785 = vmatpush1.bf16.msra.mxu0 0
        %786 = vmatprep.subr.bf16.mxu0 0
        %787 = vmatpush1.bf16.msra.mxu0 0
        %788 = vmatprep.subr.bf16.mxu0 0
        %789 = vmatpush1.bf16.msra.mxu0 0
        %790 = vmatprep.mubr.bf16.mxu0 0
        %791 = vmatmul.mubr.bf16.gmra.mrb[0].mxu0 %v753
        %v792 = vpop.f32.mrb[0].mxu0
        %v793 = vadd.f32 0.0, %v792
        %v794 = vpop.f32.mrb[0].mxu0
        %v795 = vpop.f32.mrb[0].mxu0
        %v796 = vpop.f32.mrb[0].mxu0
        %797 = vdwg.mxu0
        %799 = vrot.lane.b32.xlu0 %v793, 16
        %v800 = vpop.permute.xlu0 %799
        %v802 = vsel %vm567, %v680, %v800
        %v803 = vpack.c.bf16 %v802, %v802
        %v804 = vld [vmem:[%s447] sm:$0xf]
        %v805 = vld [vmem:[%s447 + $0x4] sm:$0xf]
        %v806 = vld [vmem:[%s447 + $0x8] sm:$0xf]
        %v807 = vld [vmem:[%s447 + $0xc] sm:$0xf]
        %v808 = vlaneseq
        %v809 = vshrl.u32 %v808, 7
        %v810 = vsub.s32 1, %v809
        %v811 = vrot.slane %v463, %v810
        %v816 = vunpack.c.l.b16 %v804
        %v817 = vunpack.c.l.b16 %v805
        %v818 = vunpack.c.l.b16 %v806
        %v819 = vunpack.c.l.b16 %v807
        %v820 = vpack.c.b16 %v817, %v816
        %v821 = vpack.c.b16 %v819, %v818
        %v825 = vsel %vm518, %v803, 0
        %827 = vmatprep.subr.bf16.mxu0 0
        %828 = vmatpush1.bf16.msra.mxu0 %v820
        %829 = vmatprep.subr.bf16.mxu0 0
        %830 = vmatpush1.bf16.msra.mxu0 %v821
        %831 = vmatprep.subr.bf16.mxu0 0
        %832 = vmatpush1.bf16.msra.mxu0 0
        %833 = vmatprep.subr.bf16.mxu0 0
        %834 = vmatpush1.bf16.msra.mxu0 0
        %835 = vmatprep.subr.bf16.mxu0 0
        %836 = vmatpush1.bf16.msra.mxu0 0
        %837 = vmatprep.subr.bf16.mxu0 0
        %838 = vmatpush1.bf16.msra.mxu0 0
        %839 = vmatprep.subr.bf16.mxu0 0
        %840 = vmatpush1.bf16.msra.mxu0 0
        %841 = vmatprep.subr.bf16.mxu0 0
        %842 = vmatpush1.bf16.msra.mxu0 0
        %843 = vmatprep.subr.bf16.mxu0 0
        %844 = vmatpush1.bf16.msra.mxu0 0
        %845 = vmatprep.subr.bf16.mxu0 0
        %846 = vmatpush1.bf16.msra.mxu0 0
        %847 = vmatprep.subr.bf16.mxu0 0
        %848 = vmatpush1.bf16.msra.mxu0 0
        %849 = vmatprep.subr.bf16.mxu0 0
        %850 = vmatpush1.bf16.msra.mxu0 0
        %851 = vmatprep.subr.bf16.mxu0 0
        %852 = vmatpush1.bf16.msra.mxu0 0
        %853 = vmatprep.subr.bf16.mxu0 0
        %854 = vmatpush1.bf16.msra.mxu0 0
        %855 = vmatprep.subr.bf16.mxu0 0
        %856 = vmatpush1.bf16.msra.mxu0 0
        %857 = vmatprep.subr.bf16.mxu0 0
        %858 = vmatpush1.bf16.msra.mxu0 0
        %859 = vmatprep.mubr.bf16.mxu0 0
        %860 = vmatmul.mubr.bf16.gmra.mrb[0].mxu0 %v825
        %v861 = vpop.f32.mrb[0].mxu0
        %v862 = vadd.f32 %v811, %v861
        %v863 = vpop.f32.mrb[0].mxu0
        %v864 = vpop.f32.mrb[0].mxu0
        %v865 = vpop.f32.mrb[0].mxu0
        %866 = vdwg.mxu0
        %v867 = vadd.f32 %v862, %v496
        %v868 = vsel %vm518, %v867, 0.0
        %869 = vadd.xlane.f32.xlu0 %v868
        %v870 = vpop.xlane.xlu0 %869
        %v871 = vrcp.pop 32.0
        %v872 = vmul.f32 %v870, %v871
        %v873 = vsub.f32 %v867, %v872
        %v874 = vmul.f32 %v873, %v873
        %v875 = vsel %vm518, %v874, 0.0
        %876 = vadd.xlane.f32.xlu0 %v875
        %v877 = vpop.xlane.xlu0 %876
        %v878 = vmul.f32 %v877, %v871
        %v879 = vadd.f32 %v878, 1e-12
        %v880 = vrsqrt.pop %v879
        %v881 = vmul.f32 %v873, %v880
        %v882 = vlaneseq
        %v883 = vshrl.u32 %v882, 7
        %v884 = vsub.s32 2, %v883
        %v885 = vrot.slane %v463, %v884
        %v886 = vmul.f32 %v881, %v885
        %v887 = vlaneseq
        %v888 = vshrl.u32 %v887, 7
        %v889 = vsub.s32 3, %v888
        %v890 = vrot.slane %v463, %v889
        %v891 = vadd.f32 %v886, %v890
        %v892 = vpack.c.bf16 %v891, %v891
        %v893 = vld [vmem:[%s452] sm:$0xf]
        %v894 = vld [vmem:[%s452 + $0x4] sm:$0xf]
        %v895 = vld [vmem:[%s452 + $0x8] sm:$0xf]
        %v896 = vld [vmem:[%s452 + $0xc] sm:$0xf]
        %v897 = vlaneseq
        %v898 = vshrl.u32 %v897, 7
        %v899 = vsub.s32 4, %v898
        %v900 = vrot.slane %v463, %v899
        %v905 = vunpack.c.l.b16 %v893
        %v906 = vunpack.c.l.b16 %v894
        %v907 = vunpack.c.l.b16 %v895
        %v908 = vunpack.c.l.b16 %v896
        %v909 = vpack.c.b16 %v906, %v905
        %v910 = vpack.c.b16 %v908, %v907
        %v914 = vsel %vm518, %v892, 0
        %916 = vmatprep.subr.bf16.mxu0 0
        %917 = vmatpush1.bf16.msra.mxu0 %v909
        %918 = vmatprep.subr.bf16.mxu0 0
        %919 = vmatpush1.bf16.msra.mxu0 %v910
        %920 = vmatprep.subr.bf16.mxu0 0
        %921 = vmatpush1.bf16.msra.mxu0 0
        %922 = vmatprep.subr.bf16.mxu0 0
        %923 = vmatpush1.bf16.msra.mxu0 0
        %924 = vmatprep.subr.bf16.mxu0 0
        %925 = vmatpush1.bf16.msra.mxu0 0
        %926 = vmatprep.subr.bf16.mxu0 0
        %927 = vmatpush1.bf16.msra.mxu0 0
        %928 = vmatprep.subr.bf16.mxu0 0
        %929 = vmatpush1.bf16.msra.mxu0 0
        %930 = vmatprep.subr.bf16.mxu0 0
        %931 = vmatpush1.bf16.msra.mxu0 0
        %932 = vmatprep.subr.bf16.mxu0 0
        %933 = vmatpush1.bf16.msra.mxu0 0
        %934 = vmatprep.subr.bf16.mxu0 0
        %935 = vmatpush1.bf16.msra.mxu0 0
        %936 = vmatprep.subr.bf16.mxu0 0
        %937 = vmatpush1.bf16.msra.mxu0 0
        %938 = vmatprep.subr.bf16.mxu0 0
        %939 = vmatpush1.bf16.msra.mxu0 0
        %940 = vmatprep.subr.bf16.mxu0 0
        %941 = vmatpush1.bf16.msra.mxu0 0
        %942 = vmatprep.subr.bf16.mxu0 0
        %943 = vmatpush1.bf16.msra.mxu0 0
        %944 = vmatprep.subr.bf16.mxu0 0
        %945 = vmatpush1.bf16.msra.mxu0 0
        %946 = vmatprep.subr.bf16.mxu0 0
        %947 = vmatpush1.bf16.msra.mxu0 0
        %948 = vmatprep.mubr.bf16.mxu0 0
        %949 = vmatmul.mubr.bf16.gmra.mrb[0].mxu0 %v914
        %v950 = vpop.f32.mrb[0].mxu0
        %v951 = vadd.f32 %v900, %v950
        %v952 = vpop.f32.mrb[0].mxu0
        %v953 = vpop.f32.mrb[0].mxu0
        %v954 = vpop.f32.mrb[0].mxu0
        %955 = vdwg.mxu0
        %v956 = vmul.f32 %v951, %v951
        %v957 = vmul.f32 %v951, %v956
        %v958 = vmul.f32 %v957, 0.044715
        %v959 = vadd.f32 %v951, %v958
        %v960 = vmul.f32 %v959, 0.7978846
        %v961 = vtanh.pop %v960
        %v962 = vadd.f32 %v961, 1.0
        %v963 = vmul.f32 %v962, 0.5
        %v964 = vmul.f32 %v951, %v963
        %v965 = vpack.c.bf16 %v964, %v964
        %v966 = vld [vmem:[%s457] sm:$0xf]
        %v967 = vld [vmem:[%s457 + $0x4] sm:$0xf]
        %v968 = vld [vmem:[%s457 + $0x8] sm:$0xf]
        %v969 = vld [vmem:[%s457 + $0xc] sm:$0xf]
        %v970 = vld [vmem:[%s457 + $0x10] sm:$0xf]
        %v971 = vld [vmem:[%s457 + $0x14] sm:$0xf]
        %v972 = vld [vmem:[%s457 + $0x18] sm:$0xf]
        %v973 = vld [vmem:[%s457 + $0x1c] sm:$0xf]
        %v974 = vlaneseq
        %v975 = vshrl.u32 %v974, 7
        %v976 = vsub.s32 5, %v975
        %v977 = vrot.slane %v463, %v976
        %v986 = vunpack.c.l.b16 %v966
        %v987 = vunpack.c.l.b16 %v967
        %v988 = vunpack.c.l.b16 %v968
        %v989 = vunpack.c.l.b16 %v969
        %v990 = vunpack.c.l.b16 %v970
        %v991 = vunpack.c.l.b16 %v971
        %v992 = vunpack.c.l.b16 %v972
        %v993 = vunpack.c.l.b16 %v973
        %v994 = vpack.c.b16 %v987, %v986
        %v995 = vpack.c.b16 %v989, %v988
        %v996 = vpack.c.b16 %v991, %v990
        %v997 = vpack.c.b16 %v993, %v992
        %vm1002 = vcmask 523264
        %v1004 = vsel %vm1002, %v965, 0
        %1006 = vmatprep.subr.bf16.mxu0 0
        %1007 = vmatpush1.bf16.msra.mxu0 %v994
        %1008 = vmatprep.subr.bf16.mxu0 0
        %1009 = vmatpush1.bf16.msra.mxu0 %v995
        %1010 = vmatprep.subr.bf16.mxu0 0
        %1011 = vmatpush1.bf16.msra.mxu0 %v996
        %1012 = vmatprep.subr.bf16.mxu0 0
        %1013 = vmatpush1.bf16.msra.mxu0 %v997
        %1014 = vmatprep.subr.bf16.mxu0 0
        %1015 = vmatpush1.bf16.msra.mxu0 0
        %1016 = vmatprep.subr.bf16.mxu0 0
        %1017 = vmatpush1.bf16.msra.mxu0 0
        %1018 = vmatprep.subr.bf16.mxu0 0
        %1019 = vmatpush1.bf16.msra.mxu0 0
        %1020 = vmatprep.subr.bf16.mxu0 0
        %1021 = vmatpush1.bf16.msra.mxu0 0
        %1022 = vmatprep.subr.bf16.mxu0 0
        %1023 = vmatpush1.bf16.msra.mxu0 0
        %1024 = vmatprep.subr.bf16.mxu0 0
        %1025 = vmatpush1.bf16.msra.mxu0 0
        %1026 = vmatprep.subr.bf16.mxu0 0
        %1027 = vmatpush1.bf16.msra.mxu0 0
        %1028 = vmatprep.subr.bf16.mxu0 0
        %1029 = vmatpush1.bf16.msra.mxu0 0
        %1030 = vmatprep.subr.bf16.mxu0 0
        %1031 = vmatpush1.bf16.msra.mxu0 0
        %1032 = vmatprep.subr.bf16.mxu0 0
        %1033 = vmatpush1.bf16.msra.mxu0 0
        %1034 = vmatprep.subr.bf16.mxu0 0
        %1035 = vmatpush1.bf16.msra.mxu0 0
        %1036 = vmatprep.subr.bf16.mxu0 0
        %1037 = vmatpush1.bf16.msra.mxu0 0
        %1038 = vmatprep.mubr.bf16.mxu0 0
        %1039 = vmatmul.mubr.bf16.gmra.mrb[0].mxu0 %v1004
        %v1040 = vpop.f32.mrb[0].mxu0
        %v1041 = vadd.f32 %v977, %v1040
        %v1042 = vpop.f32.mrb[0].mxu0
        %v1043 = vpop.f32.mrb[0].mxu0
        %v1044 = vpop.f32.mrb[0].mxu0
        %1045 = vdwg.mxu0
        %v1046 = vadd.f32 %v1041, %v891
        %v1047 = vsel %vm518, %v1046, 0.0
        %1048 = vadd.xlane.f32.xlu0 %v1047
        %v1049 = vpop.xlane.xlu0 %1048
        %v1050 = vmul.f32 %v1049, %v871
        %v1051 = vsub.f32 %v1046, %v1050
        %v1052 = vmul.f32 %v1051, %v1051
        %v1053 = vsel %vm518, %v1052, 0.0
        %1054 = vadd.xlane.f32.xlu0 %v1053
        %v1055 = vpop.xlane.xlu0 %1054
        %v1056 = vmul.f32 %v1055, %v871
        %v1057 = vadd.f32 %v1056, 1e-12
        %v1058 = vrsqrt.pop %v1057
        %v1059 = vmul.f32 %v1051, %v1058
        %v1060 = vlaneseq
        %v1061 = vshrl.u32 %v1060, 7
        %v1062 = vsub.s32 6, %v1061
        %v1063 = vrot.slane %v463, %v1062
        %v1064 = vmul.f32 %v1059, %v1063
        %v1065 = vlaneseq
        %v1066 = vshrl.u32 %v1065, 7
        %v1067 = vsub.s32 7, %v1066
        %v1068 = vrot.slane %v463, %v1067
        %v1069 = vadd.f32 %v1064, %v1068
        %1070 = vst.msk [vmem:[%s423] sm:$0xff] %vm518, %v1069
        %s1071 = sand.u32 %s250, 1
        %s1072 = scalar_lea.sflag [#allocation3], %s1071
        %s1073 = sand.u32 %s250, 1
        %s1074 = smul.addr %s1073, 8
        %s1075 = scalar_lea.vmem [#allocation2], %s1074
        %s1076 = sand.u32 %s276, 1
        %s1077 = scalar_lea.sflag [#allocation5], %s1076
        %s1078 = sand.u32 %s276, 1
        %s1079 = smul.addr %s1078, 16
        %s1080 = scalar_lea.vmem [#allocation4], %s1079
        // Predicated region
        $region57: #{transformer_forward.1} parent=51 // pred_check
          %p1081 = pneg %p260
        $region58: #{transformer_forward.1} parent=51 // pred_check_branch
          %1083 = sbr.rel (%p1081) target = $region60
        $region59: #{transformer_forward.1} parent=51 // pred_region
          %s1085 = ssub.s32 128, 128
          %1086 = vsyncadd %s1072, %s1085
          %s1087 = smul.addr %s31, 128
          %s1088 = scalar_lea.hbm %s8, %s1087
          %s1090 = sshll.u32 %s1075, 4
          %s1091 = int_to_ptr.vmem [resolvable:$true] %s1090
          %1093 = dma.vmem_to_hbm [thread:$0]  %s1091, 128, %s1088, %s1072
        $region60: #{transformer_forward.1} parent=51 // pred_fallthru
          _
        // Predicated region
        $region61: #{transformer_forward.1} parent=51 // pred_check
          %p1094 = pneg %p286
        $region62: #{transformer_forward.1} parent=51 // pred_check_branch
          %1096 = sbr.rel (%p1094) target = $region64
        $region63: #{transformer_forward.1} parent=51 // pred_region
          %s1098 = ssub.s32 256, 256
          %1099 = vsyncadd %s1077, %s1098
          %s1100 = smul.addr %s31, 2
          %s1101 = smul.addr %s1100, 128
          %s1102 = scalar_lea.hbm %s9, %s1101
          %s1103 = sshll.u32 %s1080, 4
          %s1104 = int_to_ptr.vmem [resolvable:$true] %s1103
          %1109 = dma.vmem_to_hbm [thread:$0]  %s1104, 256, %s1102, %s1077, 128, 128, 8
        $region64: #{transformer_forward.1} parent=51 // pred_fallthru
          _
      $region52: #{transformer_forward.1} parent=5 // pred_fallthru
        _
      %p1110 = scmp.le.s32.totalorder 2, %s22
      // Predicated region
      $region65: #{transformer_forward.1} parent=5 // pred_check
        %p1111 = pneg %p1110
      $region66: #{transformer_forward.1} parent=5 // pred_check_branch
        %1113 = sbr.rel (%p1111) target = $region68
      $region67: #{transformer_forward.1} parent=5 // pred_region
        %s1114 = ssub.s32 %s22, 2
        // Predicated region
        $region69: #{transformer_forward.1} parent=67 // pred_check
          %p1115 = pneg %p266
        $region70: #{transformer_forward.1} parent=67 // pred_check_branch
          %1117 = sbr.rel (%p1115) target = $region72
        $region71: #{transformer_forward.1} parent=67 // pred_region
          %s1118 = sand.u32 %s251, 1
          %s1119 = scalar_lea.sflag [#allocation3], %s1118
          %s1120 = sand.u32 %s251, 1
          %s1121 = smul.addr %s1120, 8
          %s1122 = scalar_lea.vmem [#allocation2], %s1121
          %1123 = dma.done %s1119, 128
        $region72: #{transformer_forward.1} parent=67 // pred_fallthru
          _
        // Predicated region
        $region73: #{transformer_forward.1} parent=67 // pred_check
          %p1124 = pneg %p292
        $region74: #{transformer_forward.1} parent=67 // pred_check_branch
          %1126 = sbr.rel (%p1124) target = $region76
        $region75: #{transformer_forward.1} parent=67 // pred_region
          %s1127 = sand.u32 %s277, 1
          %s1128 = scalar_lea.sflag [#allocation5], %s1127
          %s1129 = sand.u32 %s277, 1
          %s1130 = smul.addr %s1129, 16
          %s1131 = scalar_lea.vmem [#allocation4], %s1130
          %1132 = dma.done %s1128, 256
        $region76: #{transformer_forward.1} parent=67 // pred_fallthru
          _
      $region68: #{transformer_forward.1} parent=5 // pred_fallthru
        _
    $region6: #{transformer_forward.1} parent=1 // loop_footer
      %s26 = sadd.s32 1, %s22
    $region7: #{transformer_forward.1} parent=1 // loop_footer_branch
      %21 = sbr.rel target = $region3
    $region8: #{transformer_forward.1} parent=1 // loop_exit
      _
    %1133 = vsyncpa [#allocation3], 1
    %s1134 = scalar_lea.sflag [#allocation3], 1
    %1135 = vsyncpa %s1134, 1
    %1136 = vsyncpa [#allocation5], 1
    %s1137 = scalar_lea.sflag [#allocation5], 1
    %1138 = vsyncpa %s1137, 1

</llo_original>
